<compile_context>
chip_gen: v5e
topology: v5e:2x2
jax: 0.10.0
libtpu: 0.0.40
codegen_flags: <defaults>
</compile_context>

<pallas_src>
import functools
import math

import jax
import jax.numpy as jnp
from jax import lax
from jax.experimental import pallas as pl
from jax.experimental.pallas import tpu as pltpu


# -----------------------------------------------------------------------------
# Fused BN(eval) + ReLU + Conv2d kernel
#   grid = (Cout_tiles, B); each step: one batch image -> one (Ho, Wo, tn) tile.
# -----------------------------------------------------------------------------
def _brc_kernel(x_ref, w_ref, bns_ref, bnb_ref, cb_ref, o_ref, pad_ref,
                *, k, pad, ho, wo):
    h, w, cin = x_ref.shape

    # ---- fused eval-mode BatchNorm + ReLU prologue, f32 math ------------------
    a = x_ref[...] * bns_ref[...] + bnb_ref[...]          # per-channel affine
    a = jnp.maximum(a, 0.0)

    # Conv2d zero-padding happens AFTER bn+relu in the reference: build the padded
    # activation tile in a VMEM scratch (halo stays exactly zero).
    pad_ref[...] = jnp.zeros_like(pad_ref)
    pad_ref[pad:pad + h, pad:pad + w, :] = a

    # single bf16 cast of the whole padded tile (hoisted out of the tap loop)
    ap = pad_ref[...].astype(jnp.bfloat16)                # (Hp, Wp, Cin)

    # ---- fold ALL k*k conv taps into one deep GEMM contraction (K = k*k*Cin) ---
    parts = [ap[di:di + ho, dj:dj + wo, :] for di in range(k) for dj in range(k)]
    lhs = jnp.concatenate(parts, axis=-1).reshape(ho * wo, k * k * cin)

    acc = jnp.dot(lhs, w_ref[...], preferred_element_type=jnp.float32)
    o_ref[...] = (acc + cb_ref[...]).reshape(ho, wo, -1)  # f32 output, lane-dense


@functools.partial(jax.jit,
                   static_argnames=("cout", "kernel_size", "padding", "stride"))
def brc_forward(x_nchw, w_packed, bn_scale, bn_bias, conv_bias_padded, *,
                cout, kernel_size=3, padding=1, stride=1):
    """BRC forward: Conv2d(relu(BN(x))) + bias.  NCHW in / NCHW out."""
    if stride != 1:
        # TODO(synk): strided conv path not implemented in the fused kernel.
        raise NotImplementedError("fused BRC kernel supports stride=1 only")
    k, p = kernel_size, padding
    B, Cin, H, W = x_nchw.shape
    kkc, cout_pad = w_packed.shape
    assert kkc == k * k * Cin and cout_pad % 128 == 0 and cout <= cout_pad
    Hp, Wp = H + 2 * p, W + 2 * p
    Ho, Wo = Hp - k + 1, Wp - k + 1

    # NHWC, f32 (BN/ReLU run in f32 inside the kernel; one bf16 rounding there).
    x = jnp.transpose(x_nchw, (0, 2, 3, 1))

    # Cout tile: 256 fills the v6e/v7x MXU when possible, otherwise 128 (v5e width).
    tn = 256 if cout_pad % 256 == 0 else 128
    grid = (cout_pad // tn, B)   # Cout tiles outermost -> weight tile stays resident

    # VMEM budget: double-buffered x / weight / output blocks + the padded scratch.
    vmem_need = (2 * H * W * Cin * 4 + 2 * kkc * tn * 2 + 2 * Ho * Wo * tn * 4
                 + Hp * Wp * Cin * 4 + 2 * (Cin + tn) * 4 + (2 << 20))
    vmem_limit = int(min(48 * 1024 * 1024, max(vmem_need, 4 * 1024 * 1024)))

    kernel = functools.partial(_brc_kernel, k=k, pad=p, ho=Ho, wo=Wo)
    out = pl.pallas_call(
        kernel,
        out_shape=jax.ShapeDtypeStruct((B, Ho, Wo, cout_pad), jnp.float32),
        grid_spec=pltpu.PrefetchScalarGridSpec(
            num_scalar_prefetch=0,
            grid=grid,
            in_specs=[
                # full NHWC f32 image for batch b
                pl.BlockSpec((None, H, W, Cin), lambda n, b: (b, 0, 0, 0)),
                # packed weights (k*k*Cin, tn): index depends only on n -> resident
                pl.BlockSpec((kkc, tn), lambda n, b: (0, n)),
                pl.BlockSpec((1, Cin), lambda n, b: (0, 0)),   # BN scale
                pl.BlockSpec((1, Cin), lambda n, b: (0, 0)),   # BN bias
                pl.BlockSpec((1, tn), lambda n, b: (0, n)),    # conv bias (padded)
            ],
            out_specs=pl.BlockSpec((None, Ho, Wo, tn), lambda n, b: (b, 0, 0, n)),
            scratch_shapes=[pltpu.VMEM((Hp, Wp, Cin), jnp.float32)],
        ),
        compiler_params=pltpu.CompilerParams(
            dimension_semantics=("parallel", "parallel"),
            vmem_limit_bytes=vmem_limit),
    )(x, w_packed, bn_scale.reshape(1, Cin), bn_bias.reshape(1, Cin),
      conv_bias_padded.reshape(1, cout_pad))

    return jnp.transpose(out[..., :cout], (0, 3, 1, 2))


# -----------------------------------------------------------------------------
# Deterministic synthetic parameters (PyTorch layouts), pre-packed at build time
# -----------------------------------------------------------------------------
def make_brc_params(key, in_channels, out_channels, kernel_size=3):
    kw_, kb_, kg_, kbt_, km_, kv_ = jax.random.split(key, 6)
    fan_in = in_channels * kernel_size * kernel_size
    w = jax.random.normal(kw_, (out_channels, in_channels, kernel_size, kernel_size),
                          jnp.float32) * math.sqrt(2.0 / fan_in)
    conv_b = 0.05 * jax.random.normal(kb_, (out_channels,), jnp.float32)
    gamma = 1.0 + 0.1 * jax.random.normal(kg_, (in_channels,), jnp.float32)
    beta = 0.1 * jax.random.normal(kbt_, (in_channels,), jnp.float32)
    r_mean = 0.1 * jax.random.normal(km_, (in_channels,), jnp.float32)
    r_var = 1.0 + jnp.abs(0.1 * jax.random.normal(kv_, (in_channels,), jnp.float32))
    # eval-mode BatchNorm folded to per-channel scale/bias
    bn_scale = gamma / jnp.sqrt(r_var + 1e-5)
    bn_bias = beta - r_mean * bn_scale

    k = kernel_size
    cout_pad = ((out_channels + 127) // 128) * 128
    # (Cout, Cin, kh, kw) -> (kh, kw, Cin, Cout) -> (k*k*Cin, Cout), zero-pad Cout to
    # a 128-lane multiple (lane-dense stores / filled MXU N), bf16 once.
    w_packed = jnp.transpose(w, (2, 3, 1, 0)).reshape(k * k * in_channels, out_channels)
    w_packed = jnp.pad(w_packed, ((0, 0), (0, cout_pad - out_channels))).astype(jnp.bfloat16)
    conv_b_padded = jnp.pad(conv_b, (0, cout_pad - out_channels))
    return dict(w=w, w_packed=w_packed, conv_b=conv_b, conv_b_padded=conv_b_padded,
                bn_scale=bn_scale, bn_bias=bn_bias)


def brc_reference(params, x_nchw, *, kernel_size=3, padding=1, stride=1):
    """Pure-JAX reference of BRC (eval-mode BN -> ReLU -> Conv2d)."""
    s = params["bn_scale"].reshape(1, -1, 1, 1)
    b = params["bn_bias"].reshape(1, -1, 1, 1)
    y = jnp.maximum(x_nchw * s + b, 0.0)
    out = lax.conv_general_dilated(
        y, params["w"], window_strides=(stride, stride),
        padding=((padding, padding), (padding, padding)),
        dimension_numbers=("NCHW", "OIHW", "NCHW"))
    return out + params["conv_b"].reshape(1, -1, 1, 1)


# -----------------------------------------------------------------------------
if __name__ == "__main__":
    B, Cin, Cout, H, W = 2, 16, 32, 16, 16
    key = jax.random.PRNGKey(0)
    k_x, k_p = jax.random.split(key)
    x = jax.random.normal(k_x, (B, Cin, H, W), dtype=jnp.float32)
    params = make_brc_params(k_p, Cin, Cout, kernel_size=3)

    out = brc_forward(x, params["w_packed"], params["bn_scale"], params["bn_bias"],
                      params["conv_b_padded"], cout=Cout,
                      kernel_size=3, padding=1, stride=1)
    out = jax.block_until_ready(out)
    assert out.shape == (B, Cout, H, W), out.shape
    assert bool(jnp.all(jnp.isfinite(out)))

    ref = brc_reference(params, x, kernel_size=3, padding=1, stride=1)
    rel = float(jnp.linalg.norm(out - ref) / jnp.linalg.norm(ref))
    assert rel < 2e-2, rel
    print("KERNEL_OK")
</pallas_src>

<mosaic_0001>
module attributes {stable_mosaic.version = 11 : i64} {
  func.func @_brc_kernel(%arg0: i32, %arg1: i32, %arg2: memref<1x16x16x16xf32, #tpu.memory_space<vmem>>, %arg3: memref<144x128xbf16, #tpu.memory_space<vmem>>, %arg4: memref<1x16xf32, #tpu.memory_space<vmem>>, %arg5: memref<1x16xf32, #tpu.memory_space<vmem>>, %arg6: memref<1x128xf32, #tpu.memory_space<vmem>>, %arg7: memref<1x16x16x128xf32, #tpu.memory_space<vmem>>, %arg8: memref<18x18x16xf32, #tpu.memory_space<vmem>>) attributes {dimension_semantics = [#tpu.dimension_semantics<parallel>, #tpu.dimension_semantics<parallel>], iteration_bounds = array<i64: 1, 2>, scalar_prefetch = 0 : i64, scratch_operands = 1 : i64, tpu.core_type = #tpu.core_type<tc>, window_params = [{transform_indices = @transform_0, window_bounds = array<i64: 1, 16, 16, 16>}, {transform_indices = @transform_1, window_bounds = array<i64: 144, 128>}, {pipeline_mode = #tpu.pipeline_mode<synchronous>, transform_indices = @transform_2, window_bounds = array<i64: 1, 16>}, {pipeline_mode = #tpu.pipeline_mode<synchronous>, transform_indices = @transform_3, window_bounds = array<i64: 1, 16>}, {transform_indices = @transform_4, window_bounds = array<i64: 1, 128>}, {transform_indices = @transform_5, window_bounds = array<i64: 1, 16, 16, 128>}]} {
    %c0 = arith.constant 0 : index
    %c0_0 = arith.constant 0 : index
    %c0_1 = arith.constant 0 : index
    %c0_2 = arith.constant 0 : index
    %0 = vector.load %arg2[%c0, %c0_0, %c0_1, %c0_2] : memref<1x16x16x16xf32, #tpu.memory_space<vmem>>, vector<1x16x16x16xf32>
    %1 = vector.shape_cast %0 : vector<1x16x16x16xf32> to vector<16x16x16xf32>
    %c0_3 = arith.constant 0 : index
    %c0_4 = arith.constant 0 : index
    %2 = vector.load %arg4[%c0_3, %c0_4] : memref<1x16xf32, #tpu.memory_space<vmem>>, vector<1x16xf32>
    %3 = vector.shape_cast %2 : vector<1x16xf32> to vector<1x1x16xf32>
    %4 = vector.broadcast %3 : vector<1x1x16xf32> to vector<16x16x16xf32>
    %5 = arith.mulf %1, %4 : vector<16x16x16xf32>
    %c0_5 = arith.constant 0 : index
    %c0_6 = arith.constant 0 : index
    %6 = vector.load %arg5[%c0_5, %c0_6] : memref<1x16xf32, #tpu.memory_space<vmem>>, vector<1x16xf32>
    %7 = vector.shape_cast %6 : vector<1x16xf32> to vector<1x1x16xf32>
    %8 = vector.broadcast %7 : vector<1x1x16xf32> to vector<16x16x16xf32>
    %9 = arith.addf %5, %8 : vector<16x16x16xf32>
    %cst = arith.constant 0.000000e+00 : f32
    %10 = vector.broadcast %cst : f32 to vector<16x16x16xf32>
    %11 = arith.maximumf %9, %10 : vector<16x16x16xf32>
    %cst_7 = arith.constant 0.000000e+00 : f32
    %12 = vector.broadcast %cst_7 : f32 to vector<18x18x16xf32>
    %c0_8 = arith.constant 0 : index
    %c0_9 = arith.constant 0 : index
    %c0_10 = arith.constant 0 : index
    %13 = vector.load %arg8[%c0_8, %c0_9, %c0_10] : memref<18x18x16xf32, #tpu.memory_space<vmem>>, vector<18x18x16xf32>
    tpu.vector_store %arg8[%c0_8, %c0_9, %c0_10], %12 {strides = array<i32>} : memref<18x18x16xf32, #tpu.memory_space<vmem>>, vector<18x18x16xf32>,
    %c1 = arith.constant 1 : index
    %c1_11 = arith.constant 1 : index
    %c0_12 = arith.constant 0 : index
    %14 = vector.load %arg8[%c1, %c1_11, %c0_12] : memref<18x18x16xf32, #tpu.memory_space<vmem>>, vector<16x16x16xf32>
    tpu.vector_store %arg8[%c1, %c1_11, %c0_12], %11 {strides = array<i32>} : memref<18x18x16xf32, #tpu.memory_space<vmem>>, vector<16x16x16xf32>,
    %c0_13 = arith.constant 0 : index
    %c0_14 = arith.constant 0 : index
    %c0_15 = arith.constant 0 : index
    %15 = vector.load %arg8[%c0_13, %c0_14, %c0_15] : memref<18x18x16xf32, #tpu.memory_space<vmem>>, vector<18x18x16xf32>
    %16 = arith.truncf %15 : vector<18x18x16xf32> to vector<18x18x16xbf16>
    %17 = vector.extract_strided_slice %16 {offsets = [0, 0, 0], sizes = [16, 16, 16], strides = [1, 1, 1]} : vector<18x18x16xbf16> to vector<16x16x16xbf16>
    %18 = vector.extract_strided_slice %16 {offsets = [0, 1, 0], sizes = [16, 16, 16], strides = [1, 1, 1]} : vector<18x18x16xbf16> to vector<16x16x16xbf16>
    %19 = vector.extract_strided_slice %16 {offsets = [0, 2, 0], sizes = [16, 16, 16], strides = [1, 1, 1]} : vector<18x18x16xbf16> to vector<16x16x16xbf16>
    %20 = vector.extract_strided_slice %16 {offsets = [1, 0, 0], sizes = [16, 16, 16], strides = [1, 1, 1]} : vector<18x18x16xbf16> to vector<16x16x16xbf16>
    %21 = vector.extract_strided_slice %16 {offsets = [1, 1, 0], sizes = [16, 16, 16], strides = [1, 1, 1]} : vector<18x18x16xbf16> to vector<16x16x16xbf16>
    %22 = vector.extract_strided_slice %16 {offsets = [1, 2, 0], sizes = [16, 16, 16], strides = [1, 1, 1]} : vector<18x18x16xbf16> to vector<16x16x16xbf16>
    %23 = vector.extract_strided_slice %16 {offsets = [2, 0, 0], sizes = [16, 16, 16], strides = [1, 1, 1]} : vector<18x18x16xbf16> to vector<16x16x16xbf16>
    %24 = vector.extract_strided_slice %16 {offsets = [2, 1, 0], sizes = [16, 16, 16], strides = [1, 1, 1]} : vector<18x18x16xbf16> to vector<16x16x16xbf16>
    %25 = vector.extract_strided_slice %16 {offsets = [2, 2, 0], sizes = [16, 16, 16], strides = [1, 1, 1]} : vector<18x18x16xbf16> to vector<16x16x16xbf16>
    %26 = tpu.concatenate %17, %18, %19, %20, %21, %22, %23, %24, %25 in 2 : vector<16x16x16xbf16>, vector<16x16x16xbf16>, vector<16x16x16xbf16>, vector<16x16x16xbf16>, vector<16x16x16xbf16>, vector<16x16x16xbf16>, vector<16x16x16xbf16>, vector<16x16x16xbf16>, vector<16x16x16xbf16> -> vector<16x16x144xbf16>
    %27 = vector.shape_cast %26 : vector<16x16x144xbf16> to vector<256x144xbf16>
    %c0_16 = arith.constant 0 : index
    %c0_17 = arith.constant 0 : index
    %28 = vector.load %arg3[%c0_16, %c0_17] : memref<144x128xbf16, #tpu.memory_space<vmem>>, vector<144x128xbf16>
    %cst_18 = arith.constant dense<0.000000e+00> : vector<256x128xf32>
    %29 = tpu.matmul %27, %28, %cst_18 {dimension_numbers = #tpu.dot_dimension_numbers<[1], [0], [0], [1], [0, 0, 1, 1], [], []>} : vector<256x144xbf16>, vector<144x128xbf16>, vector<256x128xf32> -> vector<256x128xf32>
    %c0_19 = arith.constant 0 : index
    %c0_20 = arith.constant 0 : index
    %30 = vector.load %arg6[%c0_19, %c0_20] : memref<1x128xf32, #tpu.memory_space<vmem>>, vector<1x128xf32>
    %31 = vector.broadcast %30 : vector<1x128xf32> to vector<256x128xf32>
    %32 = arith.addf %29, %31 : vector<256x128xf32>
    %33 = vector.shape_cast %32 : vector<256x128xf32> to vector<16x16x128xf32>
    %c0_21 = arith.constant 0 : index
    %c0_22 = arith.constant 0 : index
    %c0_23 = arith.constant 0 : index
    %c0_24 = arith.constant 0 : index
    %34 = vector.load %arg7[%c0_21, %c0_22, %c0_23, %c0_24] : memref<1x16x16x128xf32, #tpu.memory_space<vmem>>, vector<1x16x16x128xf32>
    %35 = vector.shape_cast %34 : vector<1x16x16x128xf32> to vector<16x16x128xf32>
    %36 = vector.shape_cast %33 : vector<16x16x128xf32> to vector<1x16x16x128xf32>
    tpu.vector_store %arg7[%c0_21, %c0_22, %c0_23, %c0_24], %36 {strides = array<i32>} : memref<1x16x16x128xf32, #tpu.memory_space<vmem>>, vector<1x16x16x128xf32>,
    return
  }
  func.func @transform_0(%arg0: i32, %arg1: i32) -> (i32, i32, i32, i32) {
    %c0_i32 = arith.constant 0 : i32
    %c0_i32_0 = arith.constant 0 : i32
    %c0_i32_1 = arith.constant 0 : i32
    %c0_i32_2 = arith.constant 0 : i32
    return %arg1, %c0_i32, %c0_i32_0, %c0_i32_1 : i32, i32, i32, i32
  }
  func.func @transform_1(%arg0: i32, %arg1: i32) -> (i32, i32) {
    %c0_i32 = arith.constant 0 : i32
    %c0_i32_0 = arith.constant 0 : i32
    return %c0_i32, %arg0 : i32, i32
  }
  func.func @transform_2(%arg0: i32, %arg1: i32) -> (i32, i32) {
    %c0_i32 = arith.constant 0 : i32
    %c0_i32_0 = arith.constant 0 : i32
    %c0_i32_1 = arith.constant 0 : i32
    return %c0_i32, %c0_i32_0 : i32, i32
  }
  func.func @transform_3(%arg0: i32, %arg1: i32) -> (i32, i32) {
    %c0_i32 = arith.constant 0 : i32
    %c0_i32_0 = arith.constant 0 : i32
    %c0_i32_1 = arith.constant 0 : i32
    return %c0_i32, %c0_i32_0 : i32, i32
  }
  func.func @transform_4(%arg0: i32, %arg1: i32) -> (i32, i32) {
    %c0_i32 = arith.constant 0 : i32
    %c0_i32_0 = arith.constant 0 : i32
    return %c0_i32, %arg0 : i32, i32
  }
  func.func @transform_5(%arg0: i32, %arg1: i32) -> (i32, i32, i32, i32) {
    %c0_i32 = arith.constant 0 : i32
    %c0_i32_0 = arith.constant 0 : i32
    %c0_i32_1 = arith.constant 0 : i32
    return %arg1, %c0_i32, %c0_i32_0, %arg0 : i32, i32, i32, i32
  }
}

</mosaic_0001>

<llo_original>
// kernel: brc_forward.1
$region0: #{brc_forward.1}
  #allocation0 [shape = 'u32[]', space=smem, size = 0x4, offset = 0x4, fixed_abs, tag = 'smem constant byte address 0x4 - core index']
  #allocation1 [shape = 'u32[72,128]{1,0:T(1,128)}', space=vmem, size = 0x9000, scoped, tag = 'internal scratch']
  #allocation2 [shape = 'f32[18,18,16]{2,1,0:T(8,128)}', space=vmem, size = 0x36000, scoped, tag = 'scratch operand']
  %s0 = inlined_call_operand.vmem [shape: f32[2,16,16,16], index: 0, kind: input, shape index: {}]
  %s1 = inlined_call_operand.vmem [shape: bf16[144,128], index: 1, kind: input, shape index: {}]
  %s2 = inlined_call_operand.vmem [shape: f32[1,16], index: 2, kind: input, shape index: {}]
  %s3 = inlined_call_operand.vmem [shape: f32[1,16], index: 3, kind: input, shape index: {}]
  %s4 = inlined_call_operand.vmem [shape: f32[1,128], index: 4, kind: input, shape index: {}]
  %s5 = inlined_call_operand.vmem [shape: f32[2,16,16,128], index: 5, kind: output, shape index: {}]
  %s6 = sld [smem:[#allocation0]]
  $region53: #{brc_forward.1} parent=0
    _
  %s8 = ssub.s32 1, %s6
  %s9 = scalar_select 0, %s8, %s6
  loop: start=0, step=1, limit=4
  $region2: #{brc_forward.1} parent=0 // loop_pre_header
    _
  $region3: #{brc_forward.1} parent=0 // loop_header
    %s11 = sphi 0, %s15
    %p12 = scmp.ge.s32.totalorder %s11, 4
    %s18 = sphi 0, %s30
    %s19 = sphi 0, %s26
    %s20 = sphi 0, %s18
    %s21 = sphi 0, %s19
    %s22 = sphi 0, %s20
    %s23 = sphi 0, %s21
    %s33 = sphi 0, %s35
    %s36 = sphi 0, %s33
    %s37 = sphi 0, %s36
    %s53 = sphi 0, %s37
    %s59 = sphi 0, %s61
    %s62 = sphi 0, %s59
    %s63 = sphi 0, %s62
    %s79 = sphi 0, %s63
    %s83 = sphi 0, %s83
    %s85 = sphi 0, %s83
    %s86 = sphi 0, %s85
    %s100 = sphi 0, %s86
    %s104 = sphi 0, %s104
    %s106 = sphi 0, %s104
    %s107 = sphi 0, %s106
    %s121 = sphi 0, %s107
    %s127 = sphi 0, %s129
    %s130 = sphi 0, %s127
    %s131 = sphi 0, %s130
    %s147 = sphi 0, %s131
    %s155 = sphi 0, %s157
    %s158 = sphi 0, %s155
    %s159 = sphi 0, %s158
    %s175 = sphi 0, %s159
  $region4: #{brc_forward.1} parent=0 // loop_header_branch
    %14 = sbr.rel (%p12) target = $region8
  $region5: #{brc_forward.1} parent=0 // loop_body
    %s16 = ssub.s32 %s11, 1
    %s17 = ssub.s32 %s11, 2
    %s24 = sadd.s32 1, %s19
    %p25 = scmp.ge.s32.totalorder %s24, 2
    %s26 = scalar_select %p25, 0, %s24
    %s27 = sadd.s32 1, %s18
    %s28 = scalar_select %p25, %s27, %s18
    %p29 = scmp.ge.s32.totalorder %s28, 1
    %s30 = scalar_select %p29, 0, %s28
    %s31 = ssub.s32 %s19, %s26
    %p32 = scmp.eq.s32.totalorder %s31, 0
    %s34 = sadd.s32 %s33, 1
    %s35 = scalar_select %p32, %s33, %s34
    %p38 = pneg %p32
    %p39 = scmp.eq.s32.totalorder %s11, 1
    %p40 = por %p38, %p39
    %p41 = scmp.ne.s32.totalorder %s33, %s36
    %p42 = scmp.eq.s32.totalorder %s11, 0
    %p43 = por %p41, %p42
    %p44 = scmp.ne.s32.totalorder %s33, %s36
    %p45 = scmp.eq.s32.totalorder %s16, 1
    %p46 = por %p44, %p45
    %p47 = scmp.ne.s32.totalorder %s36, %s37
    %p48 = scmp.eq.s32.totalorder %s16, 0
    %p49 = por %p47, %p48
    %p50 = scmp.ne.s32.totalorder %s36, %s37
    %p51 = scmp.eq.s32.totalorder %s17, 1
    %p52 = por %p50, %p51
    %p54 = scmp.ne.s32.totalorder %s37, %s53
    %p55 = scmp.eq.s32.totalorder %s17, 0
    %p56 = por %p54, %p55
    %s57 = ssub.s32 %s18, %s30
    %p58 = scmp.eq.s32.totalorder %s57, 0
    %s60 = sadd.s32 %s59, 1
    %s61 = scalar_select %p58, %s59, %s60
    %p64 = pneg %p58
    %p65 = scmp.eq.s32.totalorder %s11, 1
    %p66 = por %p64, %p65
    %p67 = scmp.ne.s32.totalorder %s59, %s62
    %p68 = scmp.eq.s32.totalorder %s11, 0
    %p69 = por %p67, %p68
    %p70 = scmp.ne.s32.totalorder %s59, %s62
    %p71 = scmp.eq.s32.totalorder %s16, 1
    %p72 = por %p70, %p71
    %p73 = scmp.ne.s32.totalorder %s62, %s63
    %p74 = scmp.eq.s32.totalorder %s16, 0
    %p75 = por %p73, %p74
    %p76 = scmp.ne.s32.totalorder %s62, %s63
    %p77 = scmp.eq.s32.totalorder %s17, 1
    %p78 = por %p76, %p77
    %p80 = scmp.ne.s32.totalorder %s63, %s79
    %p81 = scmp.eq.s32.totalorder %s17, 0
    %p82 = por %p80, %p81
    %s84 = sadd.s32 %s83, 1
    %p87 = scmp.eq.s32.totalorder %s11, 1
    %p88 = scmp.ne.s32.totalorder %s83, %s85
    %p89 = scmp.eq.s32.totalorder %s11, 0
    %p90 = por %p88, %p89
    %p91 = scmp.ne.s32.totalorder %s83, %s85
    %p92 = scmp.eq.s32.totalorder %s16, 1
    %p93 = por %p91, %p92
    %p94 = scmp.ne.s32.totalorder %s85, %s86
    %p95 = scmp.eq.s32.totalorder %s16, 0
    %p96 = por %p94, %p95
    %p97 = scmp.ne.s32.totalorder %s85, %s86
    %p98 = scmp.eq.s32.totalorder %s17, 1
    %p99 = por %p97, %p98
    %p101 = scmp.ne.s32.totalorder %s86, %s100
    %p102 = scmp.eq.s32.totalorder %s17, 0
    %p103 = por %p101, %p102
    %s105 = sadd.s32 %s104, 1
    %p108 = scmp.eq.s32.totalorder %s11, 1
    %p109 = scmp.ne.s32.totalorder %s104, %s106
    %p110 = scmp.eq.s32.totalorder %s11, 0
    %p111 = por %p109, %p110
    %p112 = scmp.ne.s32.totalorder %s104, %s106
    %p113 = scmp.eq.s32.totalorder %s16, 1
    %p114 = por %p112, %p113
    %p115 = scmp.ne.s32.totalorder %s106, %s107
    %p116 = scmp.eq.s32.totalorder %s16, 0
    %p117 = por %p115, %p116
    %p118 = scmp.ne.s32.totalorder %s106, %s107
    %p119 = scmp.eq.s32.totalorder %s17, 1
    %p120 = por %p118, %p119
    %p122 = scmp.ne.s32.totalorder %s107, %s121
    %p123 = scmp.eq.s32.totalorder %s17, 0
    %p124 = por %p122, %p123
    %s125 = ssub.s32 %s18, %s30
    %p126 = scmp.eq.s32.totalorder %s125, 0
    %s128 = sadd.s32 %s127, 1
    %s129 = scalar_select %p126, %s127, %s128
    %p132 = pneg %p126
    %p133 = scmp.eq.s32.totalorder %s11, 1
    %p134 = por %p132, %p133
    %p135 = scmp.ne.s32.totalorder %s127, %s130
    %p136 = scmp.eq.s32.totalorder %s11, 0
    %p137 = por %p135, %p136
    %p138 = scmp.ne.s32.totalorder %s127, %s130
    %p139 = scmp.eq.s32.totalorder %s16, 1
    %p140 = por %p138, %p139
    %p141 = scmp.ne.s32.totalorder %s130, %s131
    %p142 = scmp.eq.s32.totalorder %s16, 0
    %p143 = por %p141, %p142
    %p144 = scmp.ne.s32.totalorder %s130, %s131
    %p145 = scmp.eq.s32.totalorder %s17, 1
    %p146 = por %p144, %p145
    %p148 = scmp.ne.s32.totalorder %s131, %s147
    %p149 = scmp.eq.s32.totalorder %s17, 0
    %p150 = por %p148, %p149
    %s151 = ssub.s32 %s19, %s26
    %s152 = ssub.s32 %s18, %s30
    %s153 = sor.u32 %s151, %s152
    %p154 = scmp.eq.s32.totalorder %s153, 0
    %s156 = sadd.s32 %s155, 1
    %s157 = scalar_select %p154, %s155, %s156
    %p160 = pneg %p154
    %p161 = scmp.eq.s32.totalorder %s11, 1
    %p162 = por %p160, %p161
    %p163 = scmp.ne.s32.totalorder %s155, %s158
    %p164 = scmp.eq.s32.totalorder %s11, 0
    %p165 = por %p163, %p164
    %p166 = scmp.ne.s32.totalorder %s155, %s158
    %p167 = scmp.eq.s32.totalorder %s16, 1
    %p168 = por %p166, %p167
    %p169 = scmp.ne.s32.totalorder %s158, %s159
    %p170 = scmp.eq.s32.totalorder %s16, 0
    %p171 = por %p169, %p170
    %p172 = scmp.ne.s32.totalorder %s158, %s159
    %p173 = scmp.eq.s32.totalorder %s17, 1
    %p174 = por %p172, %p173
    %p176 = scmp.ne.s32.totalorder %s159, %s175
    %p177 = scmp.eq.s32.totalorder %s17, 0
    %p178 = por %p176, %p177
    %p179 = scmp.le.s32.totalorder 1, %s11
    %p180 = scmp.lt.s32.totalorder %s11, 3
    %p181 = pnand %p179, %p180
    %p182 = pneg %p181
    // Predicated region
    $region9: #{brc_forward.1} parent=5 // pred_check
      _
    $region10: #{brc_forward.1} parent=5 // pred_check_branch
      %184 = sbr.rel (%p181) target = $region12
    $region11: #{brc_forward.1} parent=5 // pred_region
      %s185 = ssub.s32 %s11, 1
      // Predicated region
      $region13: #{brc_forward.1} parent=11 // pred_check
        %p186 = pneg %p75
      $region14: #{brc_forward.1} parent=11 // pred_check_branch
        %188 = sbr.rel (%p186) target = $region16
      $region15: #{brc_forward.1} parent=11 // pred_region
        %p189 = scmp.lt.s32.totalorder %s20, 0
        %s190 = scalar_select %p189, %s20, 0
        %s191 = smul.addr %s190, 4
        %s192 = scalar_lea.vmem %s1, %s191
      $region16: #{brc_forward.1} parent=11 // pred_fallthru
        _
      // Predicated region
      $region17: #{brc_forward.1} parent=11 // pred_check
        %p193 = pneg %p96
      $region18: #{brc_forward.1} parent=11 // pred_check_branch
        %195 = sbr.rel (%p193) target = $region20
      $region19: #{brc_forward.1} parent=11 // pred_region
        _
      $region20: #{brc_forward.1} parent=11 // pred_fallthru
        _
      // Predicated region
      $region21: #{brc_forward.1} parent=11 // pred_check
        %p196 = pneg %p117
      $region22: #{brc_forward.1} parent=11 // pred_check_branch
        %198 = sbr.rel (%p196) target = $region24
      $region23: #{brc_forward.1} parent=11 // pred_region
        _
      $region24: #{brc_forward.1} parent=11 // pred_fallthru
        _
      // Predicated region
      $region25: #{brc_forward.1} parent=11 // pred_check
        %p199 = pneg %p143
      $region26: #{brc_forward.1} parent=11 // pred_check_branch
        %201 = sbr.rel (%p199) target = $region28
      $region27: #{brc_forward.1} parent=11 // pred_region
        %p202 = scmp.lt.s32.totalorder %s20, 0
        %s203 = scalar_select %p202, %s20, 0
        %s204 = scalar_lea.vmem %s4, %s203
      $region28: #{brc_forward.1} parent=11 // pred_fallthru
        _
    $region12: #{brc_forward.1} parent=5 // pred_fallthru
      _
    %p205 = scmp.lt.s32.totalorder %s11, 2
    // Predicated region
    $region29: #{brc_forward.1} parent=5 // pred_check
      %p206 = pneg %p205
    $region30: #{brc_forward.1} parent=5 // pred_check_branch
      %208 = sbr.rel (%p206) target = $region32
    $region31: #{brc_forward.1} parent=5 // pred_region
      // Predicated region
      $region33: #{brc_forward.1} parent=31 // pred_check
        %p209 = pneg %p43
      $region34: #{brc_forward.1} parent=31 // pred_check_branch
        %211 = sbr.rel (%p209) target = $region36
      $region35: #{brc_forward.1} parent=31 // pred_region
        %p212 = scmp.lt.s32.totalorder %s19, 1
        %s213 = scalar_select %p212, %s19, 1
        %s214 = smul.addr %s213, 32
        %s215 = smul.addr %s214, 8
        %s216 = scalar_lea.vmem %s0, %s215
      $region36: #{brc_forward.1} parent=31 // pred_fallthru
        _
    $region32: #{brc_forward.1} parent=5 // pred_fallthru
      _
    %p217 = scmp.le.s32.totalorder 1, %s11
    %p218 = scmp.lt.s32.totalorder %s11, 3
    %p219 = pnand %p217, %p218
    %p220 = pneg %p219
    // Predicated region
    $region37: #{brc_forward.1} parent=5 // pred_check
      _
    $region38: #{brc_forward.1} parent=5 // pred_check_branch
      %222 = sbr.rel (%p219) target = $region40
    $region39: #{brc_forward.1} parent=5 // pred_region
      %s223 = ssub.s32 %s11, 1
      %p224 = scmp.lt.s32.totalorder %s21, 1
      %s225 = scalar_select %p224, %s21, 1
      %s226 = smul.addr %s225, 32
      %s227 = smul.addr %s226, 8
      %s228 = scalar_lea.vmem %s0, %s227
      %p229 = pneg %p49
      %p230 = pneg %p46
      %p231 = scmp.lt.s32.totalorder %s20, 0
      %s232 = scalar_select %p231, %s20, 0
      %s233 = smul.addr %s232, 4
      %s234 = scalar_lea.vmem %s1, %s233
      %p235 = pneg %p75
      %p236 = pneg %p72
      %p237 = pneg %p96
      %p238 = pneg %p93
      %p239 = pneg %p117
      %p240 = pneg %p114
      %p241 = scmp.lt.s32.totalorder %s20, 0
      %s242 = scalar_select %p241, %s20, 0
      %s243 = scalar_lea.vmem %s4, %s242
      %p244 = pneg %p143
      %p245 = pneg %p140
      %p246 = pneg %p171
      %p247 = pneg %p168
      %p248 = scmp.lt.s32.totalorder %s21, 1
      %s249 = scalar_select %p248, %s21, 1
      %p250 = scmp.lt.s32.totalorder %s20, 0
      %s251 = scalar_select %p250, %s20, 0
      %s252 = smul.addr %s249, 32
      %s253 = sadd.s32 %s251, %s252
      %s254 = smul.addr %s253, 8
      %s255 = scalar_lea.vmem %s5, %s254
      %p256 = scmp.lt.s32.totalorder %s21, 1
      %s257 = scalar_select %p256, %s21, 1
      %s258 = smul.addr %s257, 32
      %s259 = smul.addr %s258, 8
      %s260 = scalar_lea.vmem %s0, %s259
      %p261 = scmp.lt.s32.totalorder %s20, 0
      %s262 = scalar_select %p261, %s20, 0
      %s263 = smul.addr %s262, 4
      %s264 = scalar_lea.vmem %s1, %s263
      %p265 = scmp.lt.s32.totalorder %s20, 0
      %s266 = scalar_select %p265, %s20, 0
      %s267 = scalar_lea.vmem %s4, %s266
      %p268 = scmp.lt.s32.totalorder %s21, 1
      %s269 = scalar_select %p268, %s21, 1
      %p270 = scmp.lt.s32.totalorder %s20, 0
      %s271 = scalar_select %p270, %s20, 0
      %s272 = smul.addr %s269, 32
      %s273 = sadd.s32 %s271, %s272
      %s274 = smul.addr %s273, 8
      %s275 = scalar_lea.vmem %s5, %s274
      %v277 = vld [vmem:[%s260] sm:$0xff]
      %v278 = vld [vmem:[%s260 + $0x8] sm:$0xff]
      %v279 = vld [vmem:[%s260 + $0x10] sm:$0xff]
      %v280 = vld [vmem:[%s260 + $0x18] sm:$0xff]
      %v281 = vld [vmem:[%s260 + $0x20] sm:$0xff]
      %v282 = vld [vmem:[%s260 + $0x28] sm:$0xff]
      %v283 = vld [vmem:[%s260 + $0x30] sm:$0xff]
      %v284 = vld [vmem:[%s260 + $0x38] sm:$0xff]
      %v285 = vld [vmem:[%s260 + $0x40] sm:$0xff]
      %v286 = vld [vmem:[%s260 + $0x48] sm:$0xff]
      %v287 = vld [vmem:[%s260 + $0x50] sm:$0xff]
      %v288 = vld [vmem:[%s260 + $0x58] sm:$0xff]
      %v289 = vld [vmem:[%s260 + $0x60] sm:$0xff]
      %v290 = vld [vmem:[%s260 + $0x68] sm:$0xff]
      %v291 = vld [vmem:[%s260 + $0x70] sm:$0xff]
      %v292 = vld [vmem:[%s260 + $0x78] sm:$0xff]
      %v293 = vld [vmem:[%s260 + $0x80] sm:$0xff]
      %v294 = vld [vmem:[%s260 + $0x88] sm:$0xff]
      %v295 = vld [vmem:[%s260 + $0x90] sm:$0xff]
      %v296 = vld [vmem:[%s260 + $0x98] sm:$0xff]
      %v297 = vld [vmem:[%s260 + $0xa0] sm:$0xff]
      %v298 = vld [vmem:[%s260 + $0xa8] sm:$0xff]
      %v299 = vld [vmem:[%s260 + $0xb0] sm:$0xff]
      %v300 = vld [vmem:[%s260 + $0xb8] sm:$0xff]
      %v301 = vld [vmem:[%s260 + $0xc0] sm:$0xff]
      %v302 = vld [vmem:[%s260 + $0xc8] sm:$0xff]
      %v303 = vld [vmem:[%s260 + $0xd0] sm:$0xff]
      %v304 = vld [vmem:[%s260 + $0xd8] sm:$0xff]
      %v305 = vld [vmem:[%s260 + $0xe0] sm:$0xff]
      %v306 = vld [vmem:[%s260 + $0xe8] sm:$0xff]
      %v307 = vld [vmem:[%s260 + $0xf0] sm:$0xff]
      %v308 = vld [vmem:[%s260 + $0xf8] sm:$0xff]
      %v309 = vld [vmem:[%s2] sm:$0x1]
      %v311 = vperm.slane %v309, 0
      %v313 = vmul.f32 %v277, %v311
      %v314 = vmul.f32 %v278, %v311
      %v315 = vmul.f32 %v279, %v311
      %v316 = vmul.f32 %v280, %v311
      %v317 = vmul.f32 %v281, %v311
      %v318 = vmul.f32 %v282, %v311
      %v319 = vmul.f32 %v283, %v311
      %v320 = vmul.f32 %v284, %v311
      %v321 = vmul.f32 %v285, %v311
      %v322 = vmul.f32 %v286, %v311
      %v323 = vmul.f32 %v287, %v311
      %v324 = vmul.f32 %v288, %v311
      %v325 = vmul.f32 %v289, %v311
      %v326 = vmul.f32 %v290, %v311
      %v327 = vmul.f32 %v291, %v311
      %v328 = vmul.f32 %v292, %v311
      %v329 = vmul.f32 %v293, %v311
      %v330 = vmul.f32 %v294, %v311
      %v331 = vmul.f32 %v295, %v311
      %v332 = vmul.f32 %v296, %v311
      %v333 = vmul.f32 %v297, %v311
      %v334 = vmul.f32 %v298, %v311
      %v335 = vmul.f32 %v299, %v311
      %v336 = vmul.f32 %v300, %v311
      %v337 = vmul.f32 %v301, %v311
      %v338 = vmul.f32 %v302, %v311
      %v339 = vmul.f32 %v303, %v311
      %v340 = vmul.f32 %v304, %v311
      %v341 = vmul.f32 %v305, %v311
      %v342 = vmul.f32 %v306, %v311
      %v343 = vmul.f32 %v307, %v311
      %v344 = vmul.f32 %v308, %v311
      %v345 = vld [vmem:[%s3] sm:$0x1]
      %v347 = vperm.slane %v345, 0
      %v349 = vadd.f32 %v313, %v347
      %v350 = vadd.f32 %v314, %v347
      %v351 = vadd.f32 %v315, %v347
      %v352 = vadd.f32 %v316, %v347
      %v353 = vadd.f32 %v317, %v347
      %v354 = vadd.f32 %v318, %v347
      %v355 = vadd.f32 %v319, %v347
      %v356 = vadd.f32 %v320, %v347
      %v357 = vadd.f32 %v321, %v347
      %v358 = vadd.f32 %v322, %v347
      %v359 = vadd.f32 %v323, %v347
      %v360 = vadd.f32 %v324, %v347
      %v361 = vadd.f32 %v325, %v347
      %v362 = vadd.f32 %v326, %v347
      %v363 = vadd.f32 %v327, %v347
      %v364 = vadd.f32 %v328, %v347
      %v365 = vadd.f32 %v329, %v347
      %v366 = vadd.f32 %v330, %v347
      %v367 = vadd.f32 %v331, %v347
      %v368 = vadd.f32 %v332, %v347
      %v369 = vadd.f32 %v333, %v347
      %v370 = vadd.f32 %v334, %v347
      %v371 = vadd.f32 %v335, %v347
      %v372 = vadd.f32 %v336, %v347
      %v373 = vadd.f32 %v337, %v347
      %v374 = vadd.f32 %v338, %v347
      %v375 = vadd.f32 %v339, %v347
      %v376 = vadd.f32 %v340, %v347
      %v377 = vadd.f32 %v341, %v347
      %v378 = vadd.f32 %v342, %v347
      %v379 = vadd.f32 %v343, %v347
      %v380 = vadd.f32 %v344, %v347
      %v381 = vmax.f32 %v349, 0.0
      %v382 = vmax.f32 %v350, 0.0
      %v383 = vmax.f32 %v351, 0.0
      %v384 = vmax.f32 %v352, 0.0
      %v385 = vmax.f32 %v353, 0.0
      %v386 = vmax.f32 %v354, 0.0
      %v387 = vmax.f32 %v355, 0.0
      %v388 = vmax.f32 %v356, 0.0
      %v389 = vmax.f32 %v357, 0.0
      %v390 = vmax.f32 %v358, 0.0
      %v391 = vmax.f32 %v359, 0.0
      %v392 = vmax.f32 %v360, 0.0
      %v393 = vmax.f32 %v361, 0.0
      %v394 = vmax.f32 %v362, 0.0
      %v395 = vmax.f32 %v363, 0.0
      %v396 = vmax.f32 %v364, 0.0
      %v397 = vmax.f32 %v365, 0.0
      %v398 = vmax.f32 %v366, 0.0
      %v399 = vmax.f32 %v367, 0.0
      %v400 = vmax.f32 %v368, 0.0
      %v401 = vmax.f32 %v369, 0.0
      %v402 = vmax.f32 %v370, 0.0
      %v403 = vmax.f32 %v371, 0.0
      %v404 = vmax.f32 %v372, 0.0
      %v405 = vmax.f32 %v373, 0.0
      %v406 = vmax.f32 %v374, 0.0
      %v407 = vmax.f32 %v375, 0.0
      %v408 = vmax.f32 %v376, 0.0
      %v409 = vmax.f32 %v377, 0.0
      %v410 = vmax.f32 %v378, 0.0
      %v411 = vmax.f32 %v379, 0.0
      %v412 = vmax.f32 %v380, 0.0
      %vm413 = vcmask 130048
      %414 = vst.msk [vmem:[#allocation2] sm:$0xff] %vm413, 0.0
      %415 = vst.msk [vmem:[#allocation2 + $0x8] sm:$0xff] %vm413, 0.0
      %vm416 = vcmask 123904
      %417 = vst.msk [vmem:[#allocation2 + $0x10] sm:$0x3] %vm416, 0.0
      %418 = vst.msk [vmem:[#allocation2 + $0x18] sm:$0xff] %vm413, 0.0
      %419 = vst.msk [vmem:[#allocation2 + $0x20] sm:$0xff] %vm413, 0.0
      %420 = vst.msk [vmem:[#allocation2 + $0x28] sm:$0x3] %vm416, 0.0
      %421 = vst.msk [vmem:[#allocation2 + $0x30] sm:$0xff] %vm413, 0.0
      %422 = vst.msk [vmem:[#allocation2 + $0x38] sm:$0xff] %vm413, 0.0
      %423 = vst.msk [vmem:[#allocation2 + $0x40] sm:$0x3] %vm416, 0.0
      %424 = vst.msk [vmem:[#allocation2 + $0x48] sm:$0xff] %vm413, 0.0
      %425 = vst.msk [vmem:[#allocation2 + $0x50] sm:$0xff] %vm413, 0.0
      %426 = vst.msk [vmem:[#allocation2 + $0x58] sm:$0x3] %vm416, 0.0
      %427 = vst.msk [vmem:[#allocation2 + $0x60] sm:$0xff] %vm413, 0.0
      %428 = vst.msk [vmem:[#allocation2 + $0x68] sm:$0xff] %vm413, 0.0
      %429 = vst.msk [vmem:[#allocation2 + $0x70] sm:$0x3] %vm416, 0.0
      %430 = vst.msk [vmem:[#allocation2 + $0x78] sm:$0xff] %vm413, 0.0
      %431 = vst.msk [vmem:[#allocation2 + $0x80] sm:$0xff] %vm413, 0.0
      %432 = vst.msk [vmem:[#allocation2 + $0x88] sm:$0x3] %vm416, 0.0
      %433 = vst.msk [vmem:[#allocation2 + $0x90] sm:$0xff] %vm413, 0.0
      %434 = vst.msk [vmem:[#allocation2 + $0x98] sm:$0xff] %vm413, 0.0
      %435 = vst.msk [vmem:[#allocation2 + $0xa0] sm:$0x3] %vm416, 0.0
      %436 = vst.msk [vmem:[#allocation2 + $0xa8] sm:$0xff] %vm413, 0.0
      %437 = vst.msk [vmem:[#allocation2 + $0xb0] sm:$0xff] %vm413, 0.0
      %438 = vst.msk [vmem:[#allocation2 + $0xb8] sm:$0x3] %vm416, 0.0
      %439 = vst.msk [vmem:[#allocation2 + $0xc0] sm:$0xff] %vm413, 0.0
      %440 = vst.msk [vmem:[#allocation2 + $0xc8] sm:$0xff] %vm413, 0.0
      %441 = vst.msk [vmem:[#allocation2 + $0xd0] sm:$0x3] %vm416, 0.0
      %442 = vst.msk [vmem:[#allocation2 + $0xd8] sm:$0xff] %vm413, 0.0
      %443 = vst.msk [vmem:[#allocation2 + $0xe0] sm:$0xff] %vm413, 0.0
      %444 = vst.msk [vmem:[#allocation2 + $0xe8] sm:$0x3] %vm416, 0.0
      %445 = vst.msk [vmem:[#allocation2 + $0xf0] sm:$0xff] %vm413, 0.0
      %446 = vst.msk [vmem:[#allocation2 + $0xf8] sm:$0xff] %vm413, 0.0
      %447 = vst.msk [vmem:[#allocation2 + $0x100] sm:$0x3] %vm416, 0.0
      %448 = vst.msk [vmem:[#allocation2 + $0x108] sm:$0xff] %vm413, 0.0
      %449 = vst.msk [vmem:[#allocation2 + $0x110] sm:$0xff] %vm413, 0.0
      %450 = vst.msk [vmem:[#allocation2 + $0x118] sm:$0x3] %vm416, 0.0
      %451 = vst.msk [vmem:[#allocation2 + $0x120] sm:$0xff] %vm413, 0.0
      %452 = vst.msk [vmem:[#allocation2 + $0x128] sm:$0xff] %vm413, 0.0
      %453 = vst.msk [vmem:[#allocation2 + $0x130] sm:$0x3] %vm416, 0.0
      %454 = vst.msk [vmem:[#allocation2 + $0x138] sm:$0xff] %vm413, 0.0
      %455 = vst.msk [vmem:[#allocation2 + $0x140] sm:$0xff] %vm413, 0.0
      %456 = vst.msk [vmem:[#allocation2 + $0x148] sm:$0x3] %vm416, 0.0
      %457 = vst.msk [vmem:[#allocation2 + $0x150] sm:$0xff] %vm413, 0.0
      %458 = vst.msk [vmem:[#allocation2 + $0x158] sm:$0xff] %vm413, 0.0
      %459 = vst.msk [vmem:[#allocation2 + $0x160] sm:$0x3] %vm416, 0.0
      %460 = vst.msk [vmem:[#allocation2 + $0x168] sm:$0xff] %vm413, 0.0
      %461 = vst.msk [vmem:[#allocation2 + $0x170] sm:$0xff] %vm413, 0.0
      %462 = vst.msk [vmem:[#allocation2 + $0x178] sm:$0x3] %vm416, 0.0
      %463 = vst.msk [vmem:[#allocation2 + $0x180] sm:$0xff] %vm413, 0.0
      %464 = vst.msk [vmem:[#allocation2 + $0x188] sm:$0xff] %vm413, 0.0
      %465 = vst.msk [vmem:[#allocation2 + $0x190] sm:$0x3] %vm416, 0.0
      %466 = vst.msk [vmem:[#allocation2 + $0x198] sm:$0xff] %vm413, 0.0
      %467 = vst.msk [vmem:[#allocation2 + $0x1a0] sm:$0xff] %vm413, 0.0
      %468 = vst.msk [vmem:[#allocation2 + $0x1a8] sm:$0x3] %vm416, 0.0
      %s469 = scalar_lea.vmem [#allocation2], 24
      %470 = vst.msk [vmem:[%s469 + $0x1] sm:$0xff] %vm413, %v381
      %471 = vst.msk [vmem:[%s469 + $0x9] sm:$0xff] %vm413, %v382
      %472 = vst.msk [vmem:[%s469 + $0x19] sm:$0xff] %vm413, %v383
      %473 = vst.msk [vmem:[%s469 + $0x21] sm:$0xff] %vm413, %v384
      %474 = vst.msk [vmem:[%s469 + $0x31] sm:$0xff] %vm413, %v385
      %475 = vst.msk [vmem:[%s469 + $0x39] sm:$0xff] %vm413, %v386
      %476 = vst.msk [vmem:[%s469 + $0x49] sm:$0xff] %vm413, %v387
      %477 = vst.msk [vmem:[%s469 + $0x51] sm:$0xff] %vm413, %v388
      %478 = vst.msk [vmem:[%s469 + $0x61] sm:$0xff] %vm413, %v389
      %479 = vst.msk [vmem:[%s469 + $0x69] sm:$0xff] %vm413, %v390
      %480 = vst.msk [vmem:[%s469 + $0x79] sm:$0xff] %vm413, %v391
      %481 = vst.msk [vmem:[%s469 + $0x81] sm:$0xff] %vm413, %v392
      %482 = vst.msk [vmem:[%s469 + $0x91] sm:$0xff] %vm413, %v393
      %483 = vst.msk [vmem:[%s469 + $0x99] sm:$0xff] %vm413, %v394
      %484 = vst.msk [vmem:[%s469 + $0xa9] sm:$0xff] %vm413, %v395
      %485 = vst.msk [vmem:[%s469 + $0xb1] sm:$0xff] %vm413, %v396
      %486 = vst.msk [vmem:[%s469 + $0xc1] sm:$0xff] %vm413, %v397
      %487 = vst.msk [vmem:[%s469 + $0xc9] sm:$0xff] %vm413, %v398
      %488 = vst.msk [vmem:[%s469 + $0xd9] sm:$0xff] %vm413, %v399
      %489 = vst.msk [vmem:[%s469 + $0xe1] sm:$0xff] %vm413, %v400
      %490 = vst.msk [vmem:[%s469 + $0xf1] sm:$0xff] %vm413, %v401
      %491 = vst.msk [vmem:[%s469 + $0xf9] sm:$0xff] %vm413, %v402
      %492 = vst.msk [vmem:[%s469 + $0x109] sm:$0xff] %vm413, %v403
      %493 = vst.msk [vmem:[%s469 + $0x111] sm:$0xff] %vm413, %v404
      %494 = vst.msk [vmem:[%s469 + $0x121] sm:$0xff] %vm413, %v405
      %495 = vst.msk [vmem:[%s469 + $0x129] sm:$0xff] %vm413, %v406
      %496 = vst.msk [vmem:[%s469 + $0x139] sm:$0xff] %vm413, %v407
      %497 = vst.msk [vmem:[%s469 + $0x141] sm:$0xff] %vm413, %v408
      %498 = vst.msk [vmem:[%s469 + $0x151] sm:$0xff] %vm413, %v409
      %499 = vst.msk [vmem:[%s469 + $0x159] sm:$0xff] %vm413, %v410
      %500 = vst.msk [vmem:[%s469 + $0x169] sm:$0xff] %vm413, %v411
      %501 = vst.msk [vmem:[%s469 + $0x171] sm:$0xff] %vm413, %v412
      %v502 = vld [vmem:[#allocation2] sm:$0xff]
      %v503 = vld [vmem:[#allocation2 + $0x8] sm:$0xff]
      %v504 = vld [vmem:[#allocation2 + $0x10] sm:$0x3]
      %v505 = vld [vmem:[#allocation2 + $0x18] sm:$0xff]
      %v506 = vld [vmem:[#allocation2 + $0x20] sm:$0xff]
      %v507 = vld [vmem:[#allocation2 + $0x28] sm:$0x3]
      %v508 = vld [vmem:[#allocation2 + $0x30] sm:$0xff]
      %v509 = vld [vmem:[#allocation2 + $0x38] sm:$0xff]
      %v510 = vld [vmem:[#allocation2 + $0x40] sm:$0x3]
      %v511 = vld [vmem:[#allocation2 + $0x48] sm:$0xff]
      %v512 = vld [vmem:[#allocation2 + $0x50] sm:$0xff]
      %v513 = vld [vmem:[#allocation2 + $0x58] sm:$0x3]
      %v514 = vld [vmem:[#allocation2 + $0x60] sm:$0xff]
      %v515 = vld [vmem:[#allocation2 + $0x68] sm:$0xff]
      %v516 = vld [vmem:[#allocation2 + $0x70] sm:$0x3]
      %v517 = vld [vmem:[#allocation2 + $0x78] sm:$0xff]
      %v518 = vld [vmem:[#allocation2 + $0x80] sm:$0xff]
      %v519 = vld [vmem:[#allocation2 + $0x88] sm:$0x3]
      %v520 = vld [vmem:[#allocation2 + $0x90] sm:$0xff]
      %v521 = vld [vmem:[#allocation2 + $0x98] sm:$0xff]
      %v522 = vld [vmem:[#allocation2 + $0xa0] sm:$0x3]
      %v523 = vld [vmem:[#allocation2 + $0xa8] sm:$0xff]
      %v524 = vld [vmem:[#allocation2 + $0xb0] sm:$0xff]
      %v525 = vld [vmem:[#allocation2 + $0xb8] sm:$0x3]
      %v526 = vld [vmem:[#allocation2 + $0xc0] sm:$0xff]
      %v527 = vld [vmem:[#allocation2 + $0xc8] sm:$0xff]
      %v528 = vld [vmem:[#allocation2 + $0xd0] sm:$0x3]
      %v529 = vld [vmem:[#allocation2 + $0xd8] sm:$0xff]
      %v530 = vld [vmem:[#allocation2 + $0xe0] sm:$0xff]
      %v531 = vld [vmem:[#allocation2 + $0xe8] sm:$0x3]
      %v532 = vld [vmem:[#allocation2 + $0xf0] sm:$0xff]
      %v533 = vld [vmem:[#allocation2 + $0xf8] sm:$0xff]
      %v534 = vld [vmem:[#allocation2 + $0x100] sm:$0x3]
      %v535 = vld [vmem:[#allocation2 + $0x108] sm:$0xff]
      %v536 = vld [vmem:[#allocation2 + $0x110] sm:$0xff]
      %v537 = vld [vmem:[#allocation2 + $0x118] sm:$0x3]
      %v538 = vld [vmem:[#allocation2 + $0x120] sm:$0xff]
      %v539 = vld [vmem:[#allocation2 + $0x128] sm:$0xff]
      %v540 = vld [vmem:[#allocation2 + $0x130] sm:$0x3]
      %v541 = vld [vmem:[#allocation2 + $0x138] sm:$0xff]
      %v542 = vld [vmem:[#allocation2 + $0x140] sm:$0xff]
      %v543 = vld [vmem:[#allocation2 + $0x148] sm:$0x3]
      %v544 = vld [vmem:[#allocation2 + $0x150] sm:$0xff]
      %v545 = vld [vmem:[#allocation2 + $0x158] sm:$0xff]
      %v546 = vld [vmem:[#allocation2 + $0x160] sm:$0x3]
      %v547 = vld [vmem:[#allocation2 + $0x168] sm:$0xff]
      %v548 = vld [vmem:[#allocation2 + $0x170] sm:$0xff]
      %v549 = vld [vmem:[#allocation2 + $0x178] sm:$0x3]
      %v550 = vld [vmem:[#allocation2 + $0x180] sm:$0xff]
      %v551 = vld [vmem:[#allocation2 + $0x188] sm:$0xff]
      %v552 = vld [vmem:[#allocation2 + $0x190] sm:$0x3]
      %v553 = vld [vmem:[#allocation2 + $0x198] sm:$0xff]
      %v554 = vld [vmem:[#allocation2 + $0x1a0] sm:$0xff]
      %v555 = vld [vmem:[#allocation2 + $0x1a8] sm:$0x3]
      %v556 = vpack.c.bf16 %v502, %v502
      %v557 = vpack.c.bf16 %v503, %v503
      %v558 = vpack.c.bf16 %v504, %v504
      %v559 = vpack.c.bf16 %v505, %v505
      %v560 = vpack.c.bf16 %v506, %v506
      %v561 = vpack.c.bf16 %v507, %v507
      %v562 = vpack.c.bf16 %v508, %v508
      %v563 = vpack.c.bf16 %v509, %v509
      %v564 = vpack.c.bf16 %v510, %v510
      %v565 = vpack.c.bf16 %v511, %v511
      %v566 = vpack.c.bf16 %v512, %v512
      %v567 = vpack.c.bf16 %v513, %v513
      %v568 = vpack.c.bf16 %v514, %v514
      %v569 = vpack.c.bf16 %v515, %v515
      %v570 = vpack.c.bf16 %v516, %v516
      %v571 = vpack.c.bf16 %v517, %v517
      %v572 = vpack.c.bf16 %v518, %v518
      %v573 = vpack.c.bf16 %v519, %v519
      %v574 = vpack.c.bf16 %v520, %v520
      %v575 = vpack.c.bf16 %v521, %v521
      %v576 = vpack.c.bf16 %v522, %v522
      %v577 = vpack.c.bf16 %v523, %v523
      %v578 = vpack.c.bf16 %v524, %v524
      %v579 = vpack.c.bf16 %v525, %v525
      %v580 = vpack.c.bf16 %v526, %v526
      %v581 = vpack.c.bf16 %v527, %v527
      %v582 = vpack.c.bf16 %v528, %v528
      %v583 = vpack.c.bf16 %v529, %v529
      %v584 = vpack.c.bf16 %v530, %v530
      %v585 = vpack.c.bf16 %v531, %v531
      %v586 = vpack.c.bf16 %v532, %v532
      %v587 = vpack.c.bf16 %v533, %v533
      %v588 = vpack.c.bf16 %v534, %v534
      %v589 = vpack.c.bf16 %v535, %v535
      %v590 = vpack.c.bf16 %v536, %v536
      %v591 = vpack.c.bf16 %v537, %v537
      %v592 = vpack.c.bf16 %v538, %v538
      %v593 = vpack.c.bf16 %v539, %v539
      %v594 = vpack.c.bf16 %v540, %v540
      %v595 = vpack.c.bf16 %v541, %v541
      %v596 = vpack.c.bf16 %v542, %v542
      %v597 = vpack.c.bf16 %v543, %v543
      %v598 = vpack.c.bf16 %v544, %v544
      %v599 = vpack.c.bf16 %v545, %v545
      %v600 = vpack.c.bf16 %v546, %v546
      %v601 = vpack.c.bf16 %v547, %v547
      %v602 = vpack.c.bf16 %v548, %v548
      %v603 = vpack.c.bf16 %v549, %v549
      %v604 = vpack.c.bf16 %v550, %v550
      %v605 = vpack.c.bf16 %v551, %v551
      %v606 = vpack.c.bf16 %v552, %v552
      %v607 = vpack.c.bf16 %v553, %v553
      %v608 = vpack.c.bf16 %v554, %v554
      %v609 = vpack.c.bf16 %v555, %v555
      %v642 = vunpack.c.l.b16 %v556
      %v643 = vunpack.c.l.b16 %v557
      %v644 = vunpack.c.l.b16 %v559
      %v645 = vunpack.c.l.b16 %v560
      %v646 = vunpack.c.l.b16 %v562
      %v647 = vunpack.c.l.b16 %v563
      %v648 = vunpack.c.l.b16 %v565
      %v649 = vunpack.c.l.b16 %v566
      %v650 = vunpack.c.l.b16 %v568
      %v651 = vunpack.c.l.b16 %v569
      %v652 = vunpack.c.l.b16 %v571
      %v653 = vunpack.c.l.b16 %v572
      %v654 = vunpack.c.l.b16 %v574
      %v655 = vunpack.c.l.b16 %v575
      %v656 = vunpack.c.l.b16 %v577
      %v657 = vunpack.c.l.b16 %v578
      %v658 = vunpack.c.l.b16 %v580
      %v659 = vunpack.c.l.b16 %v581
      %v660 = vunpack.c.l.b16 %v583
      %v661 = vunpack.c.l.b16 %v584
      %v662 = vunpack.c.l.b16 %v586
      %v663 = vunpack.c.l.b16 %v587
      %v664 = vunpack.c.l.b16 %v589
      %v665 = vunpack.c.l.b16 %v590
      %v666 = vunpack.c.l.b16 %v592
      %v667 = vunpack.c.l.b16 %v593
      %v668 = vunpack.c.l.b16 %v595
      %v669 = vunpack.c.l.b16 %v596
      %v670 = vunpack.c.l.b16 %v598
      %v671 = vunpack.c.l.b16 %v599
      %v672 = vunpack.c.l.b16 %v601
      %v673 = vunpack.c.l.b16 %v602
      %v674 = vpack.c.b16 %v643, %v642
      %v675 = vpack.c.b16 %v645, %v644
      %v676 = vpack.c.b16 %v647, %v646
      %v677 = vpack.c.b16 %v649, %v648
      %v678 = vpack.c.b16 %v651, %v650
      %v679 = vpack.c.b16 %v653, %v652
      %v680 = vpack.c.b16 %v655, %v654
      %v681 = vpack.c.b16 %v657, %v656
      %v682 = vpack.c.b16 %v659, %v658
      %v683 = vpack.c.b16 %v661, %v660
      %v684 = vpack.c.b16 %v663, %v662
      %v685 = vpack.c.b16 %v665, %v664
      %v686 = vpack.c.b16 %v667, %v666
      %v687 = vpack.c.b16 %v669, %v668
      %v688 = vpack.c.b16 %v671, %v670
      %v689 = vpack.c.b16 %v673, %v672
      %v706 = vunpack.c.l.b16 %v558
      %v707 = vunpack.c.l.b16 %v561
      %v708 = vunpack.c.l.b16 %v564
      %v709 = vunpack.c.l.b16 %v567
      %v710 = vunpack.c.l.b16 %v570
      %v711 = vunpack.c.l.b16 %v573
      %v712 = vunpack.c.l.b16 %v576
      %v713 = vunpack.c.l.b16 %v579
      %v714 = vunpack.c.l.b16 %v582
      %v715 = vunpack.c.l.b16 %v585
      %v716 = vunpack.c.l.b16 %v588
      %v717 = vunpack.c.l.b16 %v591
      %v718 = vunpack.c.l.b16 %v594
      %v719 = vunpack.c.l.b16 %v597
      %v720 = vunpack.c.l.b16 %v600
      %v721 = vunpack.c.l.b16 %v603
      %v722 = vpack.c.b16 %v706, %v706
      %v723 = vpack.c.b16 %v707, %v707
      %v724 = vpack.c.b16 %v708, %v708
      %v725 = vpack.c.b16 %v709, %v709
      %v726 = vpack.c.b16 %v710, %v710
      %v727 = vpack.c.b16 %v711, %v711
      %v728 = vpack.c.b16 %v712, %v712
      %v729 = vpack.c.b16 %v713, %v713
      %v730 = vpack.c.b16 %v714, %v714
      %v731 = vpack.c.b16 %v715, %v715
      %v732 = vpack.c.b16 %v716, %v716
      %v733 = vpack.c.b16 %v717, %v717
      %v734 = vpack.c.b16 %v718, %v718
      %v735 = vpack.c.b16 %v719, %v719
      %v736 = vpack.c.b16 %v720, %v720
      %v737 = vpack.c.b16 %v721, %v721
      %vm738 = vsmask.f32 7424
      %v740 = vshrl.u32 %v674, 16
      %v742 = vshll.u32 %v674, 16
      %v744 = vrot.slane %v742, 1
      %v745 = vor.u32 %v740, %v744
      %v747 = vshll.u32 %v722, 16
      %v749 = vrot.slane %v747, 1
      %v750 = vsel %vm738, %v745, %v749
      %v752 = vshrl.u32 %v675, 16
      %v754 = vshll.u32 %v675, 16
      %v756 = vrot.slane %v754, 1
      %v757 = vor.u32 %v752, %v756
      %v759 = vshll.u32 %v723, 16
      %v761 = vrot.slane %v759, 1
      %v762 = vsel %vm738, %v757, %v761
      %v764 = vshrl.u32 %v676, 16
      %v766 = vshll.u32 %v676, 16
      %v768 = vrot.slane %v766, 1
      %v769 = vor.u32 %v764, %v768
      %v771 = vshll.u32 %v724, 16
      %v773 = vrot.slane %v771, 1
      %v774 = vsel %vm738, %v769, %v773
      %v776 = vshrl.u32 %v677, 16
      %v778 = vshll.u32 %v677, 16
      %v780 = vrot.slane %v778, 1
      %v781 = vor.u32 %v776, %v780
      %v783 = vshll.u32 %v725, 16
      %v785 = vrot.slane %v783, 1
      %v786 = vsel %vm738, %v781, %v785
      %v788 = vshrl.u32 %v678, 16
      %v790 = vshll.u32 %v678, 16
      %v792 = vrot.slane %v790, 1
      %v793 = vor.u32 %v788, %v792
      %v795 = vshll.u32 %v726, 16
      %v797 = vrot.slane %v795, 1
      %v798 = vsel %vm738, %v793, %v797
      %v800 = vshrl.u32 %v679, 16
      %v802 = vshll.u32 %v679, 16
      %v804 = vrot.slane %v802, 1
      %v805 = vor.u32 %v800, %v804
      %v807 = vshll.u32 %v727, 16
      %v809 = vrot.slane %v807, 1
      %v810 = vsel %vm738, %v805, %v809
      %v812 = vshrl.u32 %v680, 16
      %v814 = vshll.u32 %v680, 16
      %v816 = vrot.slane %v814, 1
      %v817 = vor.u32 %v812, %v816
      %v819 = vshll.u32 %v728, 16
      %v821 = vrot.slane %v819, 1
      %v822 = vsel %vm738, %v817, %v821
      %v824 = vshrl.u32 %v681, 16
      %v826 = vshll.u32 %v681, 16
      %v828 = vrot.slane %v826, 1
      %v829 = vor.u32 %v824, %v828
      %v831 = vshll.u32 %v729, 16
      %v833 = vrot.slane %v831, 1
      %v834 = vsel %vm738, %v829, %v833
      %v836 = vshrl.u32 %v682, 16
      %v838 = vshll.u32 %v682, 16
      %v840 = vrot.slane %v838, 1
      %v841 = vor.u32 %v836, %v840
      %v843 = vshll.u32 %v730, 16
      %v845 = vrot.slane %v843, 1
      %v846 = vsel %vm738, %v841, %v845
      %v848 = vshrl.u32 %v683, 16
      %v850 = vshll.u32 %v683, 16
      %v852 = vrot.slane %v850, 1
      %v853 = vor.u32 %v848, %v852
      %v855 = vshll.u32 %v731, 16
      %v857 = vrot.slane %v855, 1
      %v858 = vsel %vm738, %v853, %v857
      %v860 = vshrl.u32 %v684, 16
      %v862 = vshll.u32 %v684, 16
      %v864 = vrot.slane %v862, 1
      %v865 = vor.u32 %v860, %v864
      %v867 = vshll.u32 %v732, 16
      %v869 = vrot.slane %v867, 1
      %v870 = vsel %vm738, %v865, %v869
      %v872 = vshrl.u32 %v685, 16
      %v874 = vshll.u32 %v685, 16
      %v876 = vrot.slane %v874, 1
      %v877 = vor.u32 %v872, %v876
      %v879 = vshll.u32 %v733, 16
      %v881 = vrot.slane %v879, 1
      %v882 = vsel %vm738, %v877, %v881
      %v884 = vshrl.u32 %v686, 16
      %v886 = vshll.u32 %v686, 16
      %v888 = vrot.slane %v886, 1
      %v889 = vor.u32 %v884, %v888
      %v891 = vshll.u32 %v734, 16
      %v893 = vrot.slane %v891, 1
      %v894 = vsel %vm738, %v889, %v893
      %v896 = vshrl.u32 %v687, 16
      %v898 = vshll.u32 %v687, 16
      %v900 = vrot.slane %v898, 1
      %v901 = vor.u32 %v896, %v900
      %v903 = vshll.u32 %v735, 16
      %v905 = vrot.slane %v903, 1
      %v906 = vsel %vm738, %v901, %v905
      %v908 = vshrl.u32 %v688, 16
      %v910 = vshll.u32 %v688, 16
      %v912 = vrot.slane %v910, 1
      %v913 = vor.u32 %v908, %v912
      %v915 = vshll.u32 %v736, 16
      %v917 = vrot.slane %v915, 1
      %v918 = vsel %vm738, %v913, %v917
      %v920 = vshrl.u32 %v689, 16
      %v922 = vshll.u32 %v689, 16
      %v924 = vrot.slane %v922, 1
      %v925 = vor.u32 %v920, %v924
      %v927 = vshll.u32 %v737, 16
      %v929 = vrot.slane %v927, 1
      %v930 = vsel %vm738, %v925, %v929
      %931 = vrot.lane.b32.xlu0 %v750, 16
      %v932 = vpop.permute.xlu0 %931
      %933 = vrot.lane.b32.xlu0 %v762, 16
      %v934 = vpop.permute.xlu0 %933
      %935 = vrot.lane.b32.xlu0 %v774, 16
      %v936 = vpop.permute.xlu0 %935
      %937 = vrot.lane.b32.xlu0 %v786, 16
      %v938 = vpop.permute.xlu0 %937
      %939 = vrot.lane.b32.xlu0 %v798, 16
      %v940 = vpop.permute.xlu0 %939
      %941 = vrot.lane.b32.xlu0 %v810, 16
      %v942 = vpop.permute.xlu0 %941
      %943 = vrot.lane.b32.xlu0 %v822, 16
      %v944 = vpop.permute.xlu0 %943
      %945 = vrot.lane.b32.xlu0 %v834, 16
      %v946 = vpop.permute.xlu0 %945
      %947 = vrot.lane.b32.xlu0 %v846, 16
      %v948 = vpop.permute.xlu0 %947
      %949 = vrot.lane.b32.xlu0 %v858, 16
      %v950 = vpop.permute.xlu0 %949
      %951 = vrot.lane.b32.xlu0 %v870, 16
      %v952 = vpop.permute.xlu0 %951
      %953 = vrot.lane.b32.xlu0 %v882, 16
      %v954 = vpop.permute.xlu0 %953
      %955 = vrot.lane.b32.xlu0 %v894, 16
      %v956 = vpop.permute.xlu0 %955
      %957 = vrot.lane.b32.xlu0 %v906, 16
      %v958 = vpop.permute.xlu0 %957
      %959 = vrot.lane.b32.xlu0 %v918, 16
      %v960 = vpop.permute.xlu0 %959
      %961 = vrot.lane.b32.xlu0 %v930, 16
      %v962 = vpop.permute.xlu0 %961
      %vm963 = vcmask 1046528
      %v964 = vrot.slane %v674, 1
      %v965 = vrot.slane %v722, 1
      %v966 = vsel %vm963, %v964, %v965
      %v967 = vrot.slane %v675, 1
      %v968 = vrot.slane %v723, 1
      %v969 = vsel %vm963, %v967, %v968
      %v970 = vrot.slane %v676, 1
      %v971 = vrot.slane %v724, 1
      %v972 = vsel %vm963, %v970, %v971
      %v973 = vrot.slane %v677, 1
      %v974 = vrot.slane %v725, 1
      %v975 = vsel %vm963, %v973, %v974
      %v976 = vrot.slane %v678, 1
      %v977 = vrot.slane %v726, 1
      %v978 = vsel %vm963, %v976, %v977
      %v979 = vrot.slane %v679, 1
      %v980 = vrot.slane %v727, 1
      %v981 = vsel %vm963, %v979, %v980
      %v982 = vrot.slane %v680, 1
      %v983 = vrot.slane %v728, 1
      %v984 = vsel %vm963, %v982, %v983
      %v985 = vrot.slane %v681, 1
      %v986 = vrot.slane %v729, 1
      %v987 = vsel %vm963, %v985, %v986
      %v988 = vrot.slane %v682, 1
      %v989 = vrot.slane %v730, 1
      %v990 = vsel %vm963, %v988, %v989
      %v991 = vrot.slane %v683, 1
      %v992 = vrot.slane %v731, 1
      %v993 = vsel %vm963, %v991, %v992
      %v994 = vrot.slane %v684, 1
      %v995 = vrot.slane %v732, 1
      %v996 = vsel %vm963, %v994, %v995
      %v997 = vrot.slane %v685, 1
      %v998 = vrot.slane %v733, 1
      %v999 = vsel %vm963, %v997, %v998
      %v1000 = vrot.slane %v686, 1
      %v1001 = vrot.slane %v734, 1
      %v1002 = vsel %vm963, %v1000, %v1001
      %v1003 = vrot.slane %v687, 1
      %v1004 = vrot.slane %v735, 1
      %v1005 = vsel %vm963, %v1003, %v1004
      %v1006 = vrot.slane %v688, 1
      %v1007 = vrot.slane %v736, 1
      %v1008 = vsel %vm963, %v1006, %v1007
      %v1009 = vrot.slane %v689, 1
      %v1010 = vrot.slane %v737, 1
      %v1011 = vsel %vm963, %v1009, %v1010
      %1012 = vrot.lane.b32.xlu0 %v966, 32
      %v1013 = vpop.permute.xlu0 %1012
      %1014 = vrot.lane.b32.xlu0 %v969, 32
      %v1015 = vpop.permute.xlu0 %1014
      %1016 = vrot.lane.b32.xlu0 %v972, 32
      %v1017 = vpop.permute.xlu0 %1016
      %1018 = vrot.lane.b32.xlu0 %v975, 32
      %v1019 = vpop.permute.xlu0 %1018
      %1020 = vrot.lane.b32.xlu0 %v978, 32
      %v1021 = vpop.permute.xlu0 %1020
      %1022 = vrot.lane.b32.xlu0 %v981, 32
      %v1023 = vpop.permute.xlu0 %1022
      %1024 = vrot.lane.b32.xlu0 %v984, 32
      %v1025 = vpop.permute.xlu0 %1024
      %1026 = vrot.lane.b32.xlu0 %v987, 32
      %v1027 = vpop.permute.xlu0 %1026
      %1028 = vrot.lane.b32.xlu0 %v990, 32
      %v1029 = vpop.permute.xlu0 %1028
      %1030 = vrot.lane.b32.xlu0 %v993, 32
      %v1031 = vpop.permute.xlu0 %1030
      %1032 = vrot.lane.b32.xlu0 %v996, 32
      %v1033 = vpop.permute.xlu0 %1032
      %1034 = vrot.lane.b32.xlu0 %v999, 32
      %v1035 = vpop.permute.xlu0 %1034
      %1036 = vrot.lane.b32.xlu0 %v1002, 32
      %v1037 = vpop.permute.xlu0 %1036
      %1038 = vrot.lane.b32.xlu0 %v1005, 32
      %v1039 = vpop.permute.xlu0 %1038
      %1040 = vrot.lane.b32.xlu0 %v1008, 32
      %v1041 = vpop.permute.xlu0 %1040
      %1042 = vrot.lane.b32.xlu0 %v1011, 32
      %v1043 = vpop.permute.xlu0 %1042
      %v1046 = vunpack.c.l.b16 %v604
      %v1047 = vunpack.c.l.b16 %v605
      %v1048 = vpack.c.b16 %v1047, %v1046
      %1049 = vrot.lane.b32.xlu0 %v675, 48
      %v1050 = vpop.permute.xlu0 %1049
      %1051 = vrot.lane.b32.xlu0 %v676, 48
      %v1052 = vpop.permute.xlu0 %1051
      %1053 = vrot.lane.b32.xlu0 %v677, 48
      %v1054 = vpop.permute.xlu0 %1053
      %1055 = vrot.lane.b32.xlu0 %v678, 48
      %v1056 = vpop.permute.xlu0 %1055
      %1057 = vrot.lane.b32.xlu0 %v679, 48
      %v1058 = vpop.permute.xlu0 %1057
      %1059 = vrot.lane.b32.xlu0 %v680, 48
      %v1060 = vpop.permute.xlu0 %1059
      %1061 = vrot.lane.b32.xlu0 %v681, 48
      %v1062 = vpop.permute.xlu0 %1061
      %1063 = vrot.lane.b32.xlu0 %v682, 48
      %v1064 = vpop.permute.xlu0 %1063
      %1065 = vrot.lane.b32.xlu0 %v683, 48
      %v1066 = vpop.permute.xlu0 %1065
      %1067 = vrot.lane.b32.xlu0 %v684, 48
      %v1068 = vpop.permute.xlu0 %1067
      %1069 = vrot.lane.b32.xlu0 %v685, 48
      %v1070 = vpop.permute.xlu0 %1069
      %1071 = vrot.lane.b32.xlu0 %v686, 48
      %v1072 = vpop.permute.xlu0 %1071
      %1073 = vrot.lane.b32.xlu0 %v687, 48
      %v1074 = vpop.permute.xlu0 %1073
      %1075 = vrot.lane.b32.xlu0 %v688, 48
      %v1076 = vpop.permute.xlu0 %1075
      %1077 = vrot.lane.b32.xlu0 %v689, 48
      %v1078 = vpop.permute.xlu0 %1077
      %1079 = vrot.lane.b32.xlu0 %v1048, 48
      %v1080 = vpop.permute.xlu0 %1079
      %v1082 = vunpack.c.l.b16 %v606
      %v1083 = vpack.c.b16 %v1082, %v1082
      %v1085 = vshrl.u32 %v1048, 16
      %v1087 = vshll.u32 %v1048, 16
      %v1089 = vrot.slane %v1087, 1
      %v1090 = vor.u32 %v1085, %v1089
      %v1092 = vshll.u32 %v1083, 16
      %v1094 = vrot.slane %v1092, 1
      %v1095 = vsel %vm738, %v1090, %v1094
      %1096 = vrot.lane.b32.xlu0 %v762, 64
      %v1097 = vpop.permute.xlu0 %1096
      %1098 = vrot.lane.b32.xlu0 %v774, 64
      %v1099 = vpop.permute.xlu0 %1098
      %1100 = vrot.lane.b32.xlu0 %v786, 64
      %v1101 = vpop.permute.xlu0 %1100
      %1102 = vrot.lane.b32.xlu0 %v798, 64
      %v1103 = vpop.permute.xlu0 %1102
      %1104 = vrot.lane.b32.xlu0 %v810, 64
      %v1105 = vpop.permute.xlu0 %1104
      %1106 = vrot.lane.b32.xlu0 %v822, 64
      %v1107 = vpop.permute.xlu0 %1106
      %1108 = vrot.lane.b32.xlu0 %v834, 64
      %v1109 = vpop.permute.xlu0 %1108
      %1110 = vrot.lane.b32.xlu0 %v846, 64
      %v1111 = vpop.permute.xlu0 %1110
      %1112 = vrot.lane.b32.xlu0 %v858, 64
      %v1113 = vpop.permute.xlu0 %1112
      %1114 = vrot.lane.b32.xlu0 %v870, 64
      %v1115 = vpop.permute.xlu0 %1114
      %1116 = vrot.lane.b32.xlu0 %v882, 64
      %v1117 = vpop.permute.xlu0 %1116
      %1118 = vrot.lane.b32.xlu0 %v894, 64
      %v1119 = vpop.permute.xlu0 %1118
      %1120 = vrot.lane.b32.xlu0 %v906, 64
      %v1121 = vpop.permute.xlu0 %1120
      %1122 = vrot.lane.b32.xlu0 %v918, 64
      %v1123 = vpop.permute.xlu0 %1122
      %1124 = vrot.lane.b32.xlu0 %v930, 64
      %v1125 = vpop.permute.xlu0 %1124
      %1126 = vrot.lane.b32.xlu0 %v1095, 64
      %v1127 = vpop.permute.xlu0 %1126
      %v1128 = vrot.slane %v1048, 1
      %v1129 = vrot.slane %v1083, 1
      %v1130 = vsel %vm963, %v1128, %v1129
      %1131 = vrot.lane.b32.xlu0 %v969, 80
      %v1132 = vpop.permute.xlu0 %1131
      %1133 = vrot.lane.b32.xlu0 %v972, 80
      %v1134 = vpop.permute.xlu0 %1133
      %1135 = vrot.lane.b32.xlu0 %v975, 80
      %v1136 = vpop.permute.xlu0 %1135
      %1137 = vrot.lane.b32.xlu0 %v978, 80
      %v1138 = vpop.permute.xlu0 %1137
      %1139 = vrot.lane.b32.xlu0 %v981, 80
      %v1140 = vpop.permute.xlu0 %1139
      %1141 = vrot.lane.b32.xlu0 %v984, 80
      %v1142 = vpop.permute.xlu0 %1141
      %1143 = vrot.lane.b32.xlu0 %v987, 80
      %v1144 = vpop.permute.xlu0 %1143
      %1145 = vrot.lane.b32.xlu0 %v990, 80
      %v1146 = vpop.permute.xlu0 %1145
      %1147 = vrot.lane.b32.xlu0 %v993, 80
      %v1148 = vpop.permute.xlu0 %1147
      %1149 = vrot.lane.b32.xlu0 %v996, 80
      %v1150 = vpop.permute.xlu0 %1149
      %1151 = vrot.lane.b32.xlu0 %v999, 80
      %v1152 = vpop.permute.xlu0 %1151
      %1153 = vrot.lane.b32.xlu0 %v1002, 80
      %v1154 = vpop.permute.xlu0 %1153
      %1155 = vrot.lane.b32.xlu0 %v1005, 80
      %v1156 = vpop.permute.xlu0 %1155
      %1157 = vrot.lane.b32.xlu0 %v1008, 80
      %v1158 = vpop.permute.xlu0 %1157
      %1159 = vrot.lane.b32.xlu0 %v1011, 80
      %v1160 = vpop.permute.xlu0 %1159
      %1161 = vrot.lane.b32.xlu0 %v1130, 80
      %v1162 = vpop.permute.xlu0 %1161
      %v1165 = vunpack.c.l.b16 %v607
      %v1166 = vunpack.c.l.b16 %v608
      %v1167 = vpack.c.b16 %v1166, %v1165
      %1168 = vrot.lane.b32.xlu0 %v676, 96
      %v1169 = vpop.permute.xlu0 %1168
      %1170 = vrot.lane.b32.xlu0 %v677, 96
      %v1171 = vpop.permute.xlu0 %1170
      %1172 = vrot.lane.b32.xlu0 %v678, 96
      %v1173 = vpop.permute.xlu0 %1172
      %1174 = vrot.lane.b32.xlu0 %v679, 96
      %v1175 = vpop.permute.xlu0 %1174
      %1176 = vrot.lane.b32.xlu0 %v680, 96
      %v1177 = vpop.permute.xlu0 %1176
      %1178 = vrot.lane.b32.xlu0 %v681, 96
      %v1179 = vpop.permute.xlu0 %1178
      %1180 = vrot.lane.b32.xlu0 %v682, 96
      %v1181 = vpop.permute.xlu0 %1180
      %1182 = vrot.lane.b32.xlu0 %v683, 96
      %v1183 = vpop.permute.xlu0 %1182
      %1184 = vrot.lane.b32.xlu0 %v684, 96
      %v1185 = vpop.permute.xlu0 %1184
      %1186 = vrot.lane.b32.xlu0 %v685, 96
      %v1187 = vpop.permute.xlu0 %1186
      %1188 = vrot.lane.b32.xlu0 %v686, 96
      %v1189 = vpop.permute.xlu0 %1188
      %1190 = vrot.lane.b32.xlu0 %v687, 96
      %v1191 = vpop.permute.xlu0 %1190
      %1192 = vrot.lane.b32.xlu0 %v688, 96
      %v1193 = vpop.permute.xlu0 %1192
      %1194 = vrot.lane.b32.xlu0 %v689, 96
      %v1195 = vpop.permute.xlu0 %1194
      %1196 = vrot.lane.b32.xlu0 %v1048, 96
      %v1197 = vpop.permute.xlu0 %1196
      %1198 = vrot.lane.b32.xlu0 %v1167, 96
      %v1199 = vpop.permute.xlu0 %1198
      %v1201 = vunpack.c.l.b16 %v609
      %v1202 = vpack.c.b16 %v1201, %v1201
      %v1204 = vshrl.u32 %v1167, 16
      %v1206 = vshll.u32 %v1167, 16
      %v1208 = vrot.slane %v1206, 1
      %v1209 = vor.u32 %v1204, %v1208
      %v1211 = vshll.u32 %v1202, 16
      %v1213 = vrot.slane %v1211, 1
      %v1214 = vsel %vm738, %v1209, %v1213
      %1215 = vrot.lane.b32.xlu0 %v774, 112
      %v1216 = vpop.permute.xlu0 %1215
      %1217 = vrot.lane.b32.xlu0 %v786, 112
      %v1218 = vpop.permute.xlu0 %1217
      %1219 = vrot.lane.b32.xlu0 %v798, 112
      %v1220 = vpop.permute.xlu0 %1219
      %1221 = vrot.lane.b32.xlu0 %v810, 112
      %v1222 = vpop.permute.xlu0 %1221
      %1223 = vrot.lane.b32.xlu0 %v822, 112
      %v1224 = vpop.permute.xlu0 %1223
      %1225 = vrot.lane.b32.xlu0 %v834, 112
      %v1226 = vpop.permute.xlu0 %1225
      %1227 = vrot.lane.b32.xlu0 %v846, 112
      %v1228 = vpop.permute.xlu0 %1227
      %1229 = vrot.lane.b32.xlu0 %v858, 112
      %v1230 = vpop.permute.xlu0 %1229
      %1231 = vrot.lane.b32.xlu0 %v870, 112
      %v1232 = vpop.permute.xlu0 %1231
      %1233 = vrot.lane.b32.xlu0 %v882, 112
      %v1234 = vpop.permute.xlu0 %1233
      %1235 = vrot.lane.b32.xlu0 %v894, 112
      %v1236 = vpop.permute.xlu0 %1235
      %1237 = vrot.lane.b32.xlu0 %v906, 112
      %v1238 = vpop.permute.xlu0 %1237
      %1239 = vrot.lane.b32.xlu0 %v918, 112
      %v1240 = vpop.permute.xlu0 %1239
      %1241 = vrot.lane.b32.xlu0 %v930, 112
      %v1242 = vpop.permute.xlu0 %1241
      %1243 = vrot.lane.b32.xlu0 %v1095, 112
      %v1244 = vpop.permute.xlu0 %1243
      %1245 = vrot.lane.b32.xlu0 %v1214, 112
      %v1246 = vpop.permute.xlu0 %1245
      %v1247 = vrot.slane %v1167, 1
      %v1248 = vrot.slane %v1202, 1
      %v1249 = vsel %vm963, %v1247, %v1248
      %v1251 = vsel %vm413, %v674, %v932
      %v1253 = vsel %vm413, %v675, %v934
      %v1255 = vsel %vm413, %v676, %v936
      %v1257 = vsel %vm413, %v677, %v938
      %v1259 = vsel %vm413, %v678, %v940
      %v1261 = vsel %vm413, %v679, %v942
      %v1263 = vsel %vm413, %v680, %v944
      %v1265 = vsel %vm413, %v681, %v946
      %v1267 = vsel %vm413, %v682, %v948
      %v1269 = vsel %vm413, %v683, %v950
      %v1271 = vsel %vm413, %v684, %v952
      %v1273 = vsel %vm413, %v685, %v954
      %v1275 = vsel %vm413, %v686, %v956
      %v1277 = vsel %vm413, %v687, %v958
      %v1279 = vsel %vm413, %v688, %v960
      %v1281 = vsel %vm413, %v689, %v962
      %vm1282 = vcmask 261120
      %v1284 = vsel %vm1282, %v1251, %v1013
      %v1286 = vsel %vm1282, %v1253, %v1015
      %v1288 = vsel %vm1282, %v1255, %v1017
      %v1290 = vsel %vm1282, %v1257, %v1019
      %v1292 = vsel %vm1282, %v1259, %v1021
      %v1294 = vsel %vm1282, %v1261, %v1023
      %v1296 = vsel %vm1282, %v1263, %v1025
      %v1298 = vsel %vm1282, %v1265, %v1027
      %v1300 = vsel %vm1282, %v1267, %v1029
      %v1302 = vsel %vm1282, %v1269, %v1031
      %v1304 = vsel %vm1282, %v1271, %v1033
      %v1306 = vsel %vm1282, %v1273, %v1035
      %v1308 = vsel %vm1282, %v1275, %v1037
      %v1310 = vsel %vm1282, %v1277, %v1039
      %v1312 = vsel %vm1282, %v1279, %v1041
      %v1314 = vsel %vm1282, %v1281, %v1043
      %vm1315 = vcmask 392192
      %v1317 = vsel %vm1315, %v1284, %v1050
      %v1319 = vsel %vm1315, %v1286, %v1052
      %v1321 = vsel %vm1315, %v1288, %v1054
      %v1323 = vsel %vm1315, %v1290, %v1056
      %v1325 = vsel %vm1315, %v1292, %v1058
      %v1327 = vsel %vm1315, %v1294, %v1060
      %v1329 = vsel %vm1315, %v1296, %v1062
      %v1331 = vsel %vm1315, %v1298, %v1064
      %v1333 = vsel %vm1315, %v1300, %v1066
      %v1335 = vsel %vm1315, %v1302, %v1068
      %v1337 = vsel %vm1315, %v1304, %v1070
      %v1339 = vsel %vm1315, %v1306, %v1072
      %v1341 = vsel %vm1315, %v1308, %v1074
      %v1343 = vsel %vm1315, %v1310, %v1076
      %v1345 = vsel %vm1315, %v1312, %v1078
      %v1347 = vsel %vm1315, %v1314, %v1080
      %vm1348 = vcmask 523264
      %v1350 = vsel %vm1348, %v1317, %v1097
      %v1352 = vsel %vm1348, %v1319, %v1099
      %v1354 = vsel %vm1348, %v1321, %v1101
      %v1356 = vsel %vm1348, %v1323, %v1103
      %v1358 = vsel %vm1348, %v1325, %v1105
      %v1360 = vsel %vm1348, %v1327, %v1107
      %v1362 = vsel %vm1348, %v1329, %v1109
      %v1364 = vsel %vm1348, %v1331, %v1111
      %v1366 = vsel %vm1348, %v1333, %v1113
      %v1368 = vsel %vm1348, %v1335, %v1115
      %v1370 = vsel %vm1348, %v1337, %v1117
      %v1372 = vsel %vm1348, %v1339, %v1119
      %v1374 = vsel %vm1348, %v1341, %v1121
      %v1376 = vsel %vm1348, %v1343, %v1123
      %v1378 = vsel %vm1348, %v1345, %v1125
      %v1380 = vsel %vm1348, %v1347, %v1127
      %vm1381 = vcmask 654336
      %v1383 = vsel %vm1381, %v1350, %v1132
      %v1385 = vsel %vm1381, %v1352, %v1134
      %v1387 = vsel %vm1381, %v1354, %v1136
      %v1389 = vsel %vm1381, %v1356, %v1138
      %v1391 = vsel %vm1381, %v1358, %v1140
      %v1393 = vsel %vm1381, %v1360, %v1142
      %v1395 = vsel %vm1381, %v1362, %v1144
      %v1397 = vsel %vm1381, %v1364, %v1146
      %v1399 = vsel %vm1381, %v1366, %v1148
      %v1401 = vsel %vm1381, %v1368, %v1150
      %v1403 = vsel %vm1381, %v1370, %v1152
      %v1405 = vsel %vm1381, %v1372, %v1154
      %v1407 = vsel %vm1381, %v1374, %v1156
      %v1409 = vsel %vm1381, %v1376, %v1158
      %v1411 = vsel %vm1381, %v1378, %v1160
      %v1413 = vsel %vm1381, %v1380, %v1162
      %vm1414 = vcmask 785408
      %v1416 = vsel %vm1414, %v1383, %v1169
      %v1418 = vsel %vm1414, %v1385, %v1171
      %v1420 = vsel %vm1414, %v1387, %v1173
      %v1422 = vsel %vm1414, %v1389, %v1175
      %v1424 = vsel %vm1414, %v1391, %v1177
      %v1426 = vsel %vm1414, %v1393, %v1179
      %v1428 = vsel %vm1414, %v1395, %v1181
      %v1430 = vsel %vm1414, %v1397, %v1183
      %v1432 = vsel %vm1414, %v1399, %v1185
      %v1434 = vsel %vm1414, %v1401, %v1187
      %v1436 = vsel %vm1414, %v1403, %v1189
      %v1438 = vsel %vm1414, %v1405, %v1191
      %v1440 = vsel %vm1414, %v1407, %v1193
      %v1442 = vsel %vm1414, %v1409, %v1195
      %v1444 = vsel %vm1414, %v1411, %v1197
      %v1446 = vsel %vm1414, %v1413, %v1199
      %vm1447 = vcmask 916480
      %v1449 = vsel %vm1447, %v1416, %v1216
      %v1452 = vsel %vm1447, %v1418, %v1218
      %v1455 = vsel %vm1447, %v1420, %v1220
      %v1458 = vsel %vm1447, %v1422, %v1222
      %v1461 = vsel %vm1447, %v1424, %v1224
      %v1464 = vsel %vm1447, %v1426, %v1226
      %v1467 = vsel %vm1447, %v1428, %v1228
      %v1470 = vsel %vm1447, %v1430, %v1230
      %v1473 = vsel %vm1447, %v1432, %v1232
      %v1476 = vsel %vm1447, %v1434, %v1234
      %v1479 = vsel %vm1447, %v1436, %v1236
      %v1482 = vsel %vm1447, %v1438, %v1238
      %v1485 = vsel %vm1447, %v1440, %v1240
      %v1488 = vsel %vm1447, %v1442, %v1242
      %v1491 = vsel %vm1447, %v1444, %v1244
      %v1494 = vsel %vm1447, %v1446, %v1246
      %v1496 = vld [vmem:[%s264] sm:$0xf]
      %v1497 = vld [vmem:[%s264 + $0x4] sm:$0xf]
      %v1498 = vld [vmem:[%s264 + $0x8] sm:$0xf]
      %v1499 = vld [vmem:[%s264 + $0xc] sm:$0xf]
      %v1500 = vld [vmem:[%s264 + $0x10] sm:$0xf]
      %v1501 = vld [vmem:[%s264 + $0x14] sm:$0xf]
      %v1502 = vld [vmem:[%s264 + $0x18] sm:$0xf]
      %v1503 = vld [vmem:[%s264 + $0x1c] sm:$0xf]
      %v1504 = vld [vmem:[%s264 + $0x20] sm:$0xf]
      %v1505 = vld [vmem:[%s264 + $0x24] sm:$0xf]
      %v1506 = vld [vmem:[%s264 + $0x28] sm:$0xf]
      %v1507 = vld [vmem:[%s264 + $0x2c] sm:$0xf]
      %v1508 = vld [vmem:[%s264 + $0x30] sm:$0xf]
      %v1509 = vld [vmem:[%s264 + $0x34] sm:$0xf]
      %v1510 = vld [vmem:[%s264 + $0x38] sm:$0xf]
      %v1511 = vld [vmem:[%s264 + $0x3c] sm:$0xf]
      %v1512 = vld [vmem:[%s264 + $0x40] sm:$0xf]
      %v1513 = vld [vmem:[%s264 + $0x44] sm:$0xf]
      %v1514 = vld [vmem:[%s267] sm:$0x1]
      %v1516 = vperm.slane %v1514, 0
      %v1536 = vunpack.c.l.b16 %v1496
      %v1537 = vunpack.c.l.b16 %v1497
      %v1538 = vunpack.c.l.b16 %v1498
      %v1539 = vunpack.c.l.b16 %v1499
      %v1540 = vunpack.c.l.b16 %v1500
      %v1541 = vunpack.c.l.b16 %v1501
      %v1542 = vunpack.c.l.b16 %v1502
      %v1543 = vunpack.c.l.b16 %v1503
      %v1544 = vunpack.c.l.b16 %v1504
      %v1545 = vunpack.c.l.b16 %v1505
      %v1546 = vunpack.c.l.b16 %v1506
      %v1547 = vunpack.c.l.b16 %v1507
      %v1548 = vunpack.c.l.b16 %v1508
      %v1549 = vunpack.c.l.b16 %v1509
      %v1550 = vunpack.c.l.b16 %v1510
      %v1551 = vunpack.c.l.b16 %v1511
      %v1552 = vunpack.c.l.b16 %v1512
      %v1553 = vunpack.c.l.b16 %v1513
      %v1554 = vpack.c.b16 %v1537, %v1536
      %v1555 = vpack.c.b16 %v1539, %v1538
      %v1556 = vpack.c.b16 %v1541, %v1540
      %v1557 = vpack.c.b16 %v1543, %v1542
      %v1558 = vpack.c.b16 %v1545, %v1544
      %v1559 = vpack.c.b16 %v1547, %v1546
      %v1560 = vpack.c.b16 %v1549, %v1548
      %v1561 = vpack.c.b16 %v1551, %v1550
      %v1562 = vpack.c.b16 %v1553, %v1552
      %v1573 = vsel %vm413, %v972, 0
      %v1576 = vsel %vm413, %v975, 0
      %v1579 = vsel %vm413, %v978, 0
      %v1582 = vsel %vm413, %v981, 0
      %v1585 = vsel %vm413, %v984, 0
      %v1588 = vsel %vm413, %v987, 0
      %v1591 = vsel %vm413, %v990, 0
      %v1594 = vsel %vm413, %v993, 0
      %v1597 = vsel %vm413, %v996, 0
      %v1600 = vsel %vm413, %v999, 0
      %v1603 = vsel %vm413, %v1002, 0
      %v1606 = vsel %vm413, %v1005, 0
      %v1609 = vsel %vm413, %v1008, 0
      %v1612 = vsel %vm413, %v1011, 0
      %v1615 = vsel %vm413, %v1130, 0
      %v1618 = vsel %vm413, %v1249, 0
      %1620 = vmatpush.bf16.msra.mxu0 %v1561
      %1621 = vmatpush.bf16.msra.mxu0 %v1560
      %1622 = vmatpush.bf16.msra.mxu0 %v1559
      %1623 = vmatpush.bf16.msra.mxu0 %v1558
      %1624 = vmatpush.bf16.msra.mxu0 %v1557
      %1625 = vmatpush.bf16.msra.mxu0 %v1556
      %1626 = vmatpush.bf16.msra.mxu0 %v1555
      %1627 = vmatpush.bf16.msra.mxu0 %v1554
      %1628 = vmatmul.bf16.gmra.mxu0 %v1449
      %v1629 = vpop.f32.mrf.mxu0
      %v1630 = vadd.f32 %v1516, %v1629
      %v1631 = vpop.f32.mrf.mxu0
      %v1632 = vadd.f32 %v1516, %v1631
      %1633 = vmatmul.bf16.gmra.mxu0 %v1452
      %v1634 = vpop.f32.mrf.mxu0
      %v1635 = vadd.f32 %v1516, %v1634
      %v1636 = vpop.f32.mrf.mxu0
      %v1637 = vadd.f32 %v1516, %v1636
      %1638 = vmatmul.bf16.gmra.mxu0 %v1455
      %v1639 = vpop.f32.mrf.mxu0
      %v1640 = vadd.f32 %v1516, %v1639
      %v1641 = vpop.f32.mrf.mxu0
      %v1642 = vadd.f32 %v1516, %v1641
      %1643 = vmatmul.bf16.gmra.mxu0 %v1458
      %v1644 = vpop.f32.mrf.mxu0
      %v1645 = vadd.f32 %v1516, %v1644
      %v1646 = vpop.f32.mrf.mxu0
      %v1647 = vadd.f32 %v1516, %v1646
      %1648 = vmatmul.bf16.gmra.mxu0 %v1461
      %v1649 = vpop.f32.mrf.mxu0
      %v1650 = vadd.f32 %v1516, %v1649
      %v1651 = vpop.f32.mrf.mxu0
      %v1652 = vadd.f32 %v1516, %v1651
      %1653 = vmatmul.bf16.gmra.mxu0 %v1464
      %v1654 = vpop.f32.mrf.mxu0
      %v1655 = vadd.f32 %v1516, %v1654
      %v1656 = vpop.f32.mrf.mxu0
      %v1657 = vadd.f32 %v1516, %v1656
      %1658 = vmatmul.bf16.gmra.mxu0 %v1467
      %v1659 = vpop.f32.mrf.mxu0
      %v1660 = vadd.f32 %v1516, %v1659
      %v1661 = vpop.f32.mrf.mxu0
      %v1662 = vadd.f32 %v1516, %v1661
      %1663 = vmatmul.bf16.gmra.mxu0 %v1470
      %v1664 = vpop.f32.mrf.mxu0
      %v1665 = vadd.f32 %v1516, %v1664
      %v1666 = vpop.f32.mrf.mxu0
      %v1667 = vadd.f32 %v1516, %v1666
      %1668 = vmatmul.bf16.gmra.mxu0 %v1473
      %v1669 = vpop.f32.mrf.mxu0
      %v1670 = vadd.f32 %v1516, %v1669
      %v1671 = vpop.f32.mrf.mxu0
      %v1672 = vadd.f32 %v1516, %v1671
      %1673 = vmatmul.bf16.gmra.mxu0 %v1476
      %v1674 = vpop.f32.mrf.mxu0
      %v1675 = vadd.f32 %v1516, %v1674
      %v1676 = vpop.f32.mrf.mxu0
      %v1677 = vadd.f32 %v1516, %v1676
      %1678 = vmatmul.bf16.gmra.mxu0 %v1479
      %v1679 = vpop.f32.mrf.mxu0
      %v1680 = vadd.f32 %v1516, %v1679
      %v1681 = vpop.f32.mrf.mxu0
      %v1682 = vadd.f32 %v1516, %v1681
      %1683 = vmatmul.bf16.gmra.mxu0 %v1482
      %v1684 = vpop.f32.mrf.mxu0
      %v1685 = vadd.f32 %v1516, %v1684
      %v1686 = vpop.f32.mrf.mxu0
      %v1687 = vadd.f32 %v1516, %v1686
      %1688 = vmatmul.bf16.gmra.mxu0 %v1485
      %v1689 = vpop.f32.mrf.mxu0
      %v1690 = vadd.f32 %v1516, %v1689
      %v1691 = vpop.f32.mrf.mxu0
      %v1692 = vadd.f32 %v1516, %v1691
      %1693 = vmatmul.bf16.gmra.mxu0 %v1488
      %v1694 = vpop.f32.mrf.mxu0
      %v1695 = vadd.f32 %v1516, %v1694
      %v1696 = vpop.f32.mrf.mxu0
      %v1697 = vadd.f32 %v1516, %v1696
      %1698 = vmatmul.bf16.gmra.mxu0 %v1491
      %v1699 = vpop.f32.mrf.mxu0
      %v1700 = vadd.f32 %v1516, %v1699
      %v1701 = vpop.f32.mrf.mxu0
      %v1702 = vadd.f32 %v1516, %v1701
      %1703 = vmatmul.bf16.gmra.mxu0 %v1494
      %v1704 = vpop.f32.mrf.mxu0
      %v1705 = vadd.f32 %v1516, %v1704
      %v1706 = vpop.f32.mrf.mxu0
      %v1707 = vadd.f32 %v1516, %v1706
      %1708 = vdwg.mxu0
      %1709 = vmatpush.bf16.msra.mxu0 0
      %1710 = vmatpush.bf16.msra.mxu0 0
      %1711 = vmatpush.bf16.msra.mxu0 0
      %1712 = vmatpush.bf16.msra.mxu0 0
      %1713 = vmatpush.bf16.msra.mxu0 0
      %1714 = vmatpush.bf16.msra.mxu0 0
      %1715 = vmatpush.bf16.msra.mxu0 0
      %1716 = vmatpush.bf16.msra.mxu0 %v1562
      %1717 = vmatmul.bf16.gmra.mxu0 %v1573
      %v1718 = vpop.f32.mrf.mxu0
      %v1719 = vadd.f32 %v1630, %v1718
      %v1720 = vpop.f32.mrf.mxu0
      %v1721 = vadd.f32 %v1632, %v1720
      %1722 = vmatmul.bf16.gmra.mxu0 %v1576
      %v1723 = vpop.f32.mrf.mxu0
      %v1724 = vadd.f32 %v1635, %v1723
      %v1725 = vpop.f32.mrf.mxu0
      %v1726 = vadd.f32 %v1637, %v1725
      %1727 = vmatmul.bf16.gmra.mxu0 %v1579
      %v1728 = vpop.f32.mrf.mxu0
      %v1729 = vadd.f32 %v1640, %v1728
      %v1730 = vpop.f32.mrf.mxu0
      %v1731 = vadd.f32 %v1642, %v1730
      %1732 = vmatmul.bf16.gmra.mxu0 %v1582
      %v1733 = vpop.f32.mrf.mxu0
      %v1734 = vadd.f32 %v1645, %v1733
      %v1735 = vpop.f32.mrf.mxu0
      %v1736 = vadd.f32 %v1647, %v1735
      %1737 = vmatmul.bf16.gmra.mxu0 %v1585
      %v1738 = vpop.f32.mrf.mxu0
      %v1739 = vadd.f32 %v1650, %v1738
      %v1740 = vpop.f32.mrf.mxu0
      %v1741 = vadd.f32 %v1652, %v1740
      %1742 = vmatmul.bf16.gmra.mxu0 %v1588
      %v1743 = vpop.f32.mrf.mxu0
      %v1744 = vadd.f32 %v1655, %v1743
      %v1745 = vpop.f32.mrf.mxu0
      %v1746 = vadd.f32 %v1657, %v1745
      %1747 = vmatmul.bf16.gmra.mxu0 %v1591
      %v1748 = vpop.f32.mrf.mxu0
      %v1749 = vadd.f32 %v1660, %v1748
      %v1750 = vpop.f32.mrf.mxu0
      %v1751 = vadd.f32 %v1662, %v1750
      %1752 = vmatmul.bf16.gmra.mxu0 %v1594
      %v1753 = vpop.f32.mrf.mxu0
      %v1754 = vadd.f32 %v1665, %v1753
      %v1755 = vpop.f32.mrf.mxu0
      %v1756 = vadd.f32 %v1667, %v1755
      %1757 = vmatmul.bf16.gmra.mxu0 %v1597
      %v1758 = vpop.f32.mrf.mxu0
      %v1759 = vadd.f32 %v1670, %v1758
      %v1760 = vpop.f32.mrf.mxu0
      %v1761 = vadd.f32 %v1672, %v1760
      %1762 = vmatmul.bf16.gmra.mxu0 %v1600
      %v1763 = vpop.f32.mrf.mxu0
      %v1764 = vadd.f32 %v1675, %v1763
      %v1765 = vpop.f32.mrf.mxu0
      %v1766 = vadd.f32 %v1677, %v1765
      %1767 = vmatmul.bf16.gmra.mxu0 %v1603
      %v1768 = vpop.f32.mrf.mxu0
      %v1769 = vadd.f32 %v1680, %v1768
      %v1770 = vpop.f32.mrf.mxu0
      %v1771 = vadd.f32 %v1682, %v1770
      %1772 = vmatmul.bf16.gmra.mxu0 %v1606
      %v1773 = vpop.f32.mrf.mxu0
      %v1774 = vadd.f32 %v1685, %v1773
      %v1775 = vpop.f32.mrf.mxu0
      %v1776 = vadd.f32 %v1687, %v1775
      %1777 = vmatmul.bf16.gmra.mxu0 %v1609
      %v1778 = vpop.f32.mrf.mxu0
      %v1779 = vadd.f32 %v1690, %v1778
      %v1780 = vpop.f32.mrf.mxu0
      %v1781 = vadd.f32 %v1692, %v1780
      %1782 = vmatmul.bf16.gmra.mxu0 %v1612
      %v1783 = vpop.f32.mrf.mxu0
      %v1784 = vadd.f32 %v1695, %v1783
      %v1785 = vpop.f32.mrf.mxu0
      %v1786 = vadd.f32 %v1697, %v1785
      %1787 = vmatmul.bf16.gmra.mxu0 %v1615
      %v1788 = vpop.f32.mrf.mxu0
      %v1789 = vadd.f32 %v1700, %v1788
      %v1790 = vpop.f32.mrf.mxu0
      %v1791 = vadd.f32 %v1702, %v1790
      %1792 = vmatmul.bf16.gmra.mxu0 %v1618
      %v1793 = vpop.f32.mrf.mxu0
      %v1794 = vadd.f32 %v1705, %v1793
      %v1795 = vpop.f32.mrf.mxu0
      %v1796 = vadd.f32 %v1707, %v1795
      %1797 = vdwg.mxu0
      %1798 = vst [vmem:[%s275] sm:$0xff] %v1719
      %1799 = vst [vmem:[%s275 + $0x8] sm:$0xff] %v1721
      %1800 = vst [vmem:[%s275 + $0x10] sm:$0xff] %v1724
      %1801 = vst [vmem:[%s275 + $0x18] sm:$0xff] %v1726
      %1802 = vst [vmem:[%s275 + $0x20] sm:$0xff] %v1729
      %1803 = vst [vmem:[%s275 + $0x28] sm:$0xff] %v1731
      %1804 = vst [vmem:[%s275 + $0x30] sm:$0xff] %v1734
      %1805 = vst [vmem:[%s275 + $0x38] sm:$0xff] %v1736
      %1806 = vst [vmem:[%s275 + $0x40] sm:$0xff] %v1739
      %1807 = vst [vmem:[%s275 + $0x48] sm:$0xff] %v1741
      %1808 = vst [vmem:[%s275 + $0x50] sm:$0xff] %v1744
      %1809 = vst [vmem:[%s275 + $0x58] sm:$0xff] %v1746
      %1810 = vst [vmem:[%s275 + $0x60] sm:$0xff] %v1749
      %1811 = vst [vmem:[%s275 + $0x68] sm:$0xff] %v1751
      %1812 = vst [vmem:[%s275 + $0x70] sm:$0xff] %v1754
      %1813 = vst [vmem:[%s275 + $0x78] sm:$0xff] %v1756
      %1814 = vst [vmem:[%s275 + $0x80] sm:$0xff] %v1759
      %1815 = vst [vmem:[%s275 + $0x88] sm:$0xff] %v1761
      %1816 = vst [vmem:[%s275 + $0x90] sm:$0xff] %v1764
      %1817 = vst [vmem:[%s275 + $0x98] sm:$0xff] %v1766
      %1818 = vst [vmem:[%s275 + $0xa0] sm:$0xff] %v1769
      %1819 = vst [vmem:[%s275 + $0xa8] sm:$0xff] %v1771
      %1820 = vst [vmem:[%s275 + $0xb0] sm:$0xff] %v1774
      %1821 = vst [vmem:[%s275 + $0xb8] sm:$0xff] %v1776
      %1822 = vst [vmem:[%s275 + $0xc0] sm:$0xff] %v1779
      %1823 = vst [vmem:[%s275 + $0xc8] sm:$0xff] %v1781
      %1824 = vst [vmem:[%s275 + $0xd0] sm:$0xff] %v1784
      %1825 = vst [vmem:[%s275 + $0xd8] sm:$0xff] %v1786
      %1826 = vst [vmem:[%s275 + $0xe0] sm:$0xff] %v1789
      %1827 = vst [vmem:[%s275 + $0xe8] sm:$0xff] %v1791
      %1828 = vst [vmem:[%s275 + $0xf0] sm:$0xff] %v1794
      %1829 = vst [vmem:[%s275 + $0xf8] sm:$0xff] %v1796
      %p1830 = scmp.lt.s32.totalorder %s21, 1
      %s1831 = scalar_select %p1830, %s21, 1
      %p1832 = scmp.lt.s32.totalorder %s20, 0
      %s1833 = scalar_select %p1832, %s20, 0
      %s1834 = smul.addr %s1831, 32
      %s1835 = sadd.s32 %s1833, %s1834
      %s1836 = smul.addr %s1835, 8
      %s1837 = scalar_lea.vmem %s5, %s1836
      // Predicated region
      $region41: #{brc_forward.1} parent=39 // pred_check
        %p1838 = pneg %p168
      $region42: #{brc_forward.1} parent=39 // pred_check_branch
        %1840 = sbr.rel (%p1838) target = $region44
      $region43: #{brc_forward.1} parent=39 // pred_region
        _
      $region44: #{brc_forward.1} parent=39 // pred_fallthru
        _
    $region40: #{brc_forward.1} parent=5 // pred_fallthru
      _
    %p1841 = scmp.le.s32.totalorder 2, %s11
    // Predicated region
    $region45: #{brc_forward.1} parent=5 // pred_check
      %p1842 = pneg %p1841
    $region46: #{brc_forward.1} parent=5 // pred_check_branch
      %1844 = sbr.rel (%p1842) target = $region48
    $region47: #{brc_forward.1} parent=5 // pred_region
      %s1845 = ssub.s32 %s11, 2
      // Predicated region
      $region49: #{brc_forward.1} parent=47 // pred_check
        %p1846 = pneg %p174
      $region50: #{brc_forward.1} parent=47 // pred_check_branch
        %1848 = sbr.rel (%p1846) target = $region52
      $region51: #{brc_forward.1} parent=47 // pred_region
        %p1849 = scmp.lt.s32.totalorder %s23, 1
        %s1850 = scalar_select %p1849, %s23, 1
        %p1851 = scmp.lt.s32.totalorder %s22, 0
        %s1852 = scalar_select %p1851, %s22, 0
        %s1853 = smul.addr %s1850, 32
        %s1854 = sadd.s32 %s1852, %s1853
        %s1855 = smul.addr %s1854, 8
        %s1856 = scalar_lea.vmem %s5, %s1855
      $region52: #{brc_forward.1} parent=47 // pred_fallthru
        _
    $region48: #{brc_forward.1} parent=5 // pred_fallthru
      _
  $region6: #{brc_forward.1} parent=0 // loop_footer
    %s15 = sadd.s32 1, %s11
  $region7: #{brc_forward.1} parent=0 // loop_footer_branch
    %10 = sbr.rel target = $region3
  $region8: #{brc_forward.1} parent=0 // loop_exit
    _

</llo_original>
